<compile_context>
chip_gen: v6e
topology: v6e:2x2x1
jax: 0.10.0
libtpu: 0.0.40
codegen_flags: <defaults>
</compile_context>

<pallas_src>
import functools

import jax
import jax.numpy as jnp
import numpy as np
from jax import lax
from jax.experimental import pallas as pl
from jax.experimental.pallas import tpu as pltpu


def _deconv_bn_relu_kernel(x_ref, w_ref, scale_ref, shift_ref, o_ref):
    # ConvTranspose3d with kernel_size == stride and padding == 0 is exactly
    # X[M, Cin] @ Wflat[Cin, Cout*K^3].  The kernel is HBM-write bound
    # (Cin << 128, MXU utilization is irrelevant), so everything byte-heavy is
    # bf16 while accumulation and the BN affine stay in f32.
    y = jnp.dot(x_ref[...], w_ref[...], preferred_element_type=jnp.float32)
    o_ref[...] = jnp.maximum(y * scale_ref[...] + shift_ref[...], 0.0
                             ).astype(o_ref.dtype)


def _round_up(a, b):
    return ((a + b - 1) // b) * b


def deconvolution_layer_forward(x, weight, bias, gamma, beta, *, K, eps=1e-5,
                                tm=1024):
    """Forward of DeconvolutionLayer: ConvTranspose3d(kernel=stride=K, pad=0,
    bias=True) -> BatchNorm3d (training-mode batch stats, biased variance)
    -> ReLU.

    x:      [N, Cin, D, H, W]      (PyTorch NCDHW)
    weight: [Cin, Cout, K, K, K]   (PyTorch ConvTranspose3d layout)
    bias, gamma, beta: [Cout]
    Returns [N, Cout, D*K, H*K, W*K] in bfloat16.
    Only valid for kernel_size == stride, padding == 0 (matmul formulation).
    """
    N, Cin, D, H, W = x.shape
    Cout = weight.shape[1]
    K3 = K * K * K
    C = Cout * K3
    M = N * D * H * W

    # The conv bias is a per-channel constant; train-mode BatchNorm subtracts
    # the channel mean so it cancels exactly.  (Must be re-added if the layer
    # is ever run with eval-mode running stats.)
    del bias

    # bf16 matmul operands.  The stats below use the *same* quantized values,
    # so the normalization is consistent with what the kernel computes.
    x_flat = jnp.transpose(x, (0, 2, 3, 4, 1)).reshape(M, Cin).astype(jnp.bfloat16)
    w_flat = weight.reshape(Cin, C).astype(jnp.bfloat16)

    # ---------- BatchNorm statistics via the tiny (Cin, Cin) Gram matrix ----
    xf = x_flat.astype(jnp.float32)
    wf = w_flat.astype(jnp.float32)
    mean_x = jnp.mean(xf, axis=0, keepdims=True)                  # (1, Cin)
    cov_x = xf.T @ xf / M - mean_x.T @ mean_x                     # (Cin, Cin), centered
    col_mean = mean_x @ wf                                        # (1, C)
    col_var = jnp.sum(wf * (cov_x @ wf), axis=0, keepdims=True)   # (1, C)

    col_mean_r = col_mean.reshape(Cout, K3)
    col_var_r = col_var.reshape(Cout, K3)
    ch_mean = jnp.mean(col_mean_r, axis=1)                        # (Cout,)
    # Var over all M*K^3 elements = mean of column variances + variance of
    # column means (both non-negative sums -> no catastrophic cancellation).
    ch_var = (jnp.mean(col_var_r, axis=1)
              + jnp.mean((col_mean_r - ch_mean[:, None]) ** 2, axis=1))
    ch_var = jnp.maximum(ch_var, 0.0)                             # biased var
    inv_std = lax.rsqrt(ch_var + eps)
    scale_ch = gamma.astype(jnp.float32) * inv_std                # (Cout,)
    shift_ch = beta.astype(jnp.float32) - ch_mean * scale_ch      # (Cout,)
    scale_col = jnp.repeat(scale_ch, K3).reshape(1, C)            # (1, C) f32
    shift_col = jnp.repeat(shift_ch, K3).reshape(1, C)            # (1, C) f32

    # ---------- tile sizing + generation-aware VMEM budget -------------------
    try:
        info = pltpu.get_tpu_info()
        vmem_cap = int(getattr(info, "vmem_capacity_bytes", 64 * 1024 * 1024))
    except Exception:  # conservative fallback (v7x-sized)
        vmem_cap = 64 * 1024 * 1024
    budget = int(0.55 * vmem_cap)

    def _vmem_need(t):
        return (2 * t * Cin * 2        # x tile (bf16, double-buffered)
                + 2 * t * C * 2        # out tile (bf16, double-buffered)
                + 2 * Cin * C * 2      # resident weight (bf16)
                + 2 * 2 * C * 4        # scale / shift (f32)
                + (2 << 20))           # Mosaic internal scratch headroom

    tm = min(tm, _round_up(M, 8))
    tm = max(tm - tm % 8, 8)           # multiple of 8 sublanes
    while tm > 256 and _vmem_need(tm) > budget:
        tm //= 2
    M_pad = _round_up(M, tm)
    if M_pad != M:
        # Zero-row padding; padded output rows are sliced off below.
        x_flat = jnp.pad(x_flat, ((0, M_pad - M), (0, 0)))

    vmem_limit = int(min(max(_vmem_need(tm) + (4 << 20), 16 << 20),
                         0.75 * vmem_cap))

    z = pl.pallas_call(
        _deconv_bn_relu_kernel,
        out_shape=jax.ShapeDtypeStruct((M_pad, C), jnp.bfloat16),
        grid=(M_pad // tm,),
        in_specs=[
            pl.BlockSpec((tm, Cin), lambda j: (j, 0)),   # x row tile (bf16)
            pl.BlockSpec((Cin, C), lambda j: (0, 0)),    # weight (resident, bf16)
            pl.BlockSpec((1, C), lambda j: (0, 0)),      # per-column scale (f32)
            pl.BlockSpec((1, C), lambda j: (0, 0)),      # per-column shift (f32)
        ],
        out_specs=pl.BlockSpec((tm, C), lambda j: (j, 0)),
        compiler_params=pltpu.CompilerParams(
            dimension_semantics=("parallel",),           # v7x: shard M over TCs
            vmem_limit_bytes=vmem_limit,
        ),
    )(x_flat, w_flat, scale_col, shift_col)

    # TODO(synk): the K^3 scatter back to NCDHW (innermost dim W*K << 128
    # lanes) has no lane-dense Pallas store layout at these shapes, so the
    # final re-layout is left to XLA; it stays in bf16 to halve its traffic.
    # Emitting channels-last (N, D*K, H*K, W*K, Cout) directly would remove
    # this pass entirely if the consumer allows.
    z = z[:M].reshape(N, D, H, W, Cout, K, K, K)
    out = jnp.transpose(z, (0, 4, 1, 5, 2, 6, 3, 7)).reshape(
        N, Cout, D * K, H * K, W * K)
    return out


def _reference_forward(x, weight, bias, gamma, beta, *, K, eps=1e-5):
    """Plain-JAX f32 reference with the same semantics as the PyTorch module
    (including the conv bias, which cancels under train-mode BatchNorm)."""
    N, Cin, D, H, W = x.shape
    Cout = weight.shape[1]
    t = jnp.einsum("ncdhw,coijk->nodihjwk", x, weight)
    conv = t.reshape(N, Cout, D * K, H * K, W * K) + bias[None, :, None, None, None]
    mean = conv.mean(axis=(0, 2, 3, 4), keepdims=True)
    var = ((conv - mean) ** 2).mean(axis=(0, 2, 3, 4), keepdims=True)  # biased
    bn = (conv - mean) / jnp.sqrt(var + eps)
    bn = bn * gamma[None, :, None, None, None] + beta[None, :, None, None, None]
    return jnp.maximum(bn, 0.0)


if __name__ == "__main__":
    # DeconvolutionLayer(in_channels=4, out_channels=16, kernel_size=2, dim=3,
    #                    stride=2, padding=0, bias=True, batch_norm=True,
    #                    acti_func=nn.ReLU())
    N, Cin, D, H, W = 2, 4, 8, 8, 8
    Cout, K = 16, 2

    key = jax.random.PRNGKey(0)
    kx, kw, kb, kg, kbt = jax.random.split(key, 5)
    x = jax.random.normal(kx, (N, Cin, D, H, W), dtype=jnp.float32)
    weight = jax.random.normal(kw, (Cin, Cout, K, K, K), dtype=jnp.float32) * 0.1
    bias = jax.random.normal(kb, (Cout,), dtype=jnp.float32) * 0.1
    gamma = 1.0 + 0.1 * jax.random.normal(kg, (Cout,), dtype=jnp.float32)
    beta = 0.1 * jax.random.normal(kbt, (Cout,), dtype=jnp.float32)

    fwd = jax.jit(functools.partial(deconvolution_layer_forward, K=K))
    out = jax.block_until_ready(fwd(x, weight, bias, gamma, beta))
    assert out.shape == (N, Cout, D * K, H * K, W * K)
    assert out.dtype == jnp.bfloat16
    out_f32 = np.asarray(out.astype(jnp.float32))

    # Primary check: f32 reference on the same bf16-quantized operands
    # (isolates the intended mixed-precision approximation from kernel bugs).
    xq = x.astype(jnp.bfloat16).astype(jnp.float32)
    wq = weight.astype(jnp.bfloat16).astype(jnp.float32)
    ref_q = _reference_forward(xq, wq, bias, gamma, beta, K=K)
    np.testing.assert_allclose(out_f32, np.asarray(ref_q), rtol=2e-2, atol=2e-2)

    # Sanity check against the full-f32 reference (loose: input quantization).
    ref = _reference_forward(x, weight, bias, gamma, beta, K=K)
    np.testing.assert_allclose(out_f32, np.asarray(ref), rtol=1e-1, atol=1e-1)

    print("KERNEL_OK")
</pallas_src>

<mosaic_0001>
module attributes {stable_mosaic.version = 11 : i64} {
  func.func @_deconv_bn_relu_kernel(%arg0: i32, %arg1: memref<1024x4xbf16, #tpu.memory_space<vmem>>, %arg2: memref<4x128xbf16, #tpu.memory_space<vmem>>, %arg3: memref<1x128xf32, #tpu.memory_space<vmem>>, %arg4: memref<1x128xf32, #tpu.memory_space<vmem>>, %arg5: memref<1024x128xbf16, #tpu.memory_space<vmem>>) attributes {dimension_semantics = [#tpu.dimension_semantics<parallel>], iteration_bounds = array<i64: 1>, scalar_prefetch = 0 : i64, scratch_operands = 0 : i64, tpu.core_type = #tpu.core_type<tc>, window_params = [{transform_indices = @transform_0, window_bounds = array<i64: 1024, 4>}, {pipeline_mode = #tpu.pipeline_mode<synchronous>, transform_indices = @transform_1, window_bounds = array<i64: 4, 128>}, {pipeline_mode = #tpu.pipeline_mode<synchronous>, transform_indices = @transform_2, window_bounds = array<i64: 1, 128>}, {pipeline_mode = #tpu.pipeline_mode<synchronous>, transform_indices = @transform_3, window_bounds = array<i64: 1, 128>}, {transform_indices = @transform_4, window_bounds = array<i64: 1024, 128>}]} {
    %c0 = arith.constant 0 : index
    %c0_0 = arith.constant 0 : index
    %0 = vector.load %arg1[%c0, %c0_0] : memref<1024x4xbf16, #tpu.memory_space<vmem>>, vector<1024x4xbf16>
    %c0_1 = arith.constant 0 : index
    %c0_2 = arith.constant 0 : index
    %1 = vector.load %arg2[%c0_1, %c0_2] : memref<4x128xbf16, #tpu.memory_space<vmem>>, vector<4x128xbf16>
    %cst = arith.constant dense<0.000000e+00> : vector<1024x128xf32>
    %2 = tpu.matmul %0, %1, %cst {dimension_numbers = #tpu.dot_dimension_numbers<[1], [0], [0], [1], [0, 0, 1, 1], [], []>} : vector<1024x4xbf16>, vector<4x128xbf16>, vector<1024x128xf32> -> vector<1024x128xf32>
    %c0_3 = arith.constant 0 : index
    %c0_4 = arith.constant 0 : index
    %3 = vector.load %arg3[%c0_3, %c0_4] : memref<1x128xf32, #tpu.memory_space<vmem>>, vector<1x128xf32>
    %4 = vector.broadcast %3 : vector<1x128xf32> to vector<1024x128xf32>
    %5 = arith.mulf %2, %4 : vector<1024x128xf32>
    %c0_5 = arith.constant 0 : index
    %c0_6 = arith.constant 0 : index
    %6 = vector.load %arg4[%c0_5, %c0_6] : memref<1x128xf32, #tpu.memory_space<vmem>>, vector<1x128xf32>
    %7 = vector.broadcast %6 : vector<1x128xf32> to vector<1024x128xf32>
    %8 = arith.addf %5, %7 : vector<1024x128xf32>
    %cst_7 = arith.constant 0.000000e+00 : f32
    %9 = vector.broadcast %cst_7 : f32 to vector<1024x128xf32>
    %10 = arith.maximumf %8, %9 : vector<1024x128xf32>
    %11 = arith.truncf %10 : vector<1024x128xf32> to vector<1024x128xbf16>
    %c0_8 = arith.constant 0 : index
    %c0_9 = arith.constant 0 : index
    %12 = vector.load %arg5[%c0_8, %c0_9] : memref<1024x128xbf16, #tpu.memory_space<vmem>>, vector<1024x128xbf16>
    tpu.vector_store %arg5[%c0_8, %c0_9], %11 {strides = array<i32>} : memref<1024x128xbf16, #tpu.memory_space<vmem>>, vector<1024x128xbf16>,
    return
  }
  func.func @transform_0(%arg0: i32) -> (i32, i32) {
    %c0_i32 = arith.constant 0 : i32
    %c0_i32_0 = arith.constant 0 : i32
    return %arg0, %c0_i32 : i32, i32
  }
  func.func @transform_1(%arg0: i32) -> (i32, i32) {
    %c0_i32 = arith.constant 0 : i32
    %c0_i32_0 = arith.constant 0 : i32
    %c0_i32_1 = arith.constant 0 : i32
    return %c0_i32, %c0_i32_0 : i32, i32
  }
  func.func @transform_2(%arg0: i32) -> (i32, i32) {
    %c0_i32 = arith.constant 0 : i32
    %c0_i32_0 = arith.constant 0 : i32
    %c0_i32_1 = arith.constant 0 : i32
    return %c0_i32, %c0_i32_0 : i32, i32
  }
  func.func @transform_3(%arg0: i32) -> (i32, i32) {
    %c0_i32 = arith.constant 0 : i32
    %c0_i32_0 = arith.constant 0 : i32
    %c0_i32_1 = arith.constant 0 : i32
    return %c0_i32, %c0_i32_0 : i32, i32
  }
  func.func @transform_4(%arg0: i32) -> (i32, i32) {
    %c0_i32 = arith.constant 0 : i32
    %c0_i32_0 = arith.constant 0 : i32
    return %arg0, %c0_i32 : i32, i32
  }
}

</mosaic_0001>

<llo_original>
// kernel: deconvolution_layer_forward.1
$region0: #{deconvolution_layer_forward.1}
  #allocation0 [shape = 'u32[]', space=smem, size = 0x4, offset = 0x4, fixed_abs, tag = 'smem constant byte address 0x4 - core index']
  #allocation1 [shape = 'u32[144,128]{1,0:T(1,128)}', space=vmem, size = 0x12000, scoped, tag = 'internal scratch']
  %s0 = inlined_call_operand.vmem [shape: bf16[1024,4], index: 0, kind: input, shape index: {}]
  %s1 = inlined_call_operand.vmem [shape: bf16[4,128], index: 1, kind: input, shape index: {}]
  %s2 = inlined_call_operand.vmem [shape: f32[1,128], index: 2, kind: input, shape index: {}]
  %s3 = inlined_call_operand.vmem [shape: f32[1,128], index: 3, kind: input, shape index: {}]
  %s4 = inlined_call_operand.vmem [shape: bf16[1024,128], index: 4, kind: output, shape index: {}]
  %s5 = sld [smem:[#allocation0]]
  $region26: #{deconvolution_layer_forward.1} parent=0
    _
  %s7 = ssub.s32 1, %s5
  %s8 = scalar_select 0, %s7, %s5
  // Predicated region
  $region2: #{deconvolution_layer_forward.1} parent=0 // pred_check
    _
  $region3: #{deconvolution_layer_forward.1} parent=0 // pred_check_branch
    %10 = sbr.rel (0) target = $region5
  $region4: #{deconvolution_layer_forward.1} parent=0 // pred_region
    _
  $region5: #{deconvolution_layer_forward.1} parent=0 // pred_fallthru
    _
  // Predicated region
  $region6: #{deconvolution_layer_forward.1} parent=0 // pred_check
    _
  $region7: #{deconvolution_layer_forward.1} parent=0 // pred_check_branch
    %12 = sbr.rel (0) target = $region9
  $region8: #{deconvolution_layer_forward.1} parent=0 // pred_region
    _
  $region9: #{deconvolution_layer_forward.1} parent=0 // pred_fallthru
    _
  // Predicated region
  $region10: #{deconvolution_layer_forward.1} parent=0 // pred_check
    _
  $region11: #{deconvolution_layer_forward.1} parent=0 // pred_check_branch
    %14 = sbr.rel (0) target = $region13
  $region12: #{deconvolution_layer_forward.1} parent=0 // pred_region
    _
  $region13: #{deconvolution_layer_forward.1} parent=0 // pred_fallthru
    _
  // Predicated region
  $region14: #{deconvolution_layer_forward.1} parent=0 // pred_check
    _
  $region15: #{deconvolution_layer_forward.1} parent=0 // pred_check_branch
    %16 = sbr.rel (0) target = $region17
  $region16: #{deconvolution_layer_forward.1} parent=0 // pred_region
    _
  $region17: #{deconvolution_layer_forward.1} parent=0 // pred_fallthru
    _
  %v18 = vld [vmem:[%s0] sm:$0xf]
  %v19 = vld [vmem:[%s0 + $0x4] sm:$0xf]
  %v20 = vld [vmem:[%s0 + $0x8] sm:$0xf]
  %v21 = vld [vmem:[%s0 + $0xc] sm:$0xf]
  %v22 = vld [vmem:[%s0 + $0x10] sm:$0xf]
  %v23 = vld [vmem:[%s0 + $0x14] sm:$0xf]
  %v24 = vld [vmem:[%s0 + $0x18] sm:$0xf]
  %v25 = vld [vmem:[%s0 + $0x1c] sm:$0xf]
  %v26 = vld [vmem:[%s0 + $0x20] sm:$0xf]
  %v27 = vld [vmem:[%s0 + $0x24] sm:$0xf]
  %v28 = vld [vmem:[%s0 + $0x28] sm:$0xf]
  %v29 = vld [vmem:[%s0 + $0x2c] sm:$0xf]
  %v30 = vld [vmem:[%s0 + $0x30] sm:$0xf]
  %v31 = vld [vmem:[%s0 + $0x34] sm:$0xf]
  %v32 = vld [vmem:[%s0 + $0x38] sm:$0xf]
  %v33 = vld [vmem:[%s0 + $0x3c] sm:$0xf]
  %v34 = vld [vmem:[%s0 + $0x40] sm:$0xf]
  %v35 = vld [vmem:[%s0 + $0x44] sm:$0xf]
  %v36 = vld [vmem:[%s0 + $0x48] sm:$0xf]
  %v37 = vld [vmem:[%s0 + $0x4c] sm:$0xf]
  %v38 = vld [vmem:[%s0 + $0x50] sm:$0xf]
  %v39 = vld [vmem:[%s0 + $0x54] sm:$0xf]
  %v40 = vld [vmem:[%s0 + $0x58] sm:$0xf]
  %v41 = vld [vmem:[%s0 + $0x5c] sm:$0xf]
  %v42 = vld [vmem:[%s0 + $0x60] sm:$0xf]
  %v43 = vld [vmem:[%s0 + $0x64] sm:$0xf]
  %v44 = vld [vmem:[%s0 + $0x68] sm:$0xf]
  %v45 = vld [vmem:[%s0 + $0x6c] sm:$0xf]
  %v46 = vld [vmem:[%s0 + $0x70] sm:$0xf]
  %v47 = vld [vmem:[%s0 + $0x74] sm:$0xf]
  %v48 = vld [vmem:[%s0 + $0x78] sm:$0xf]
  %v49 = vld [vmem:[%s0 + $0x7c] sm:$0xf]
  %v50 = vld [vmem:[%s0 + $0x80] sm:$0xf]
  %v51 = vld [vmem:[%s0 + $0x84] sm:$0xf]
  %v52 = vld [vmem:[%s0 + $0x88] sm:$0xf]
  %v53 = vld [vmem:[%s0 + $0x8c] sm:$0xf]
  %v54 = vld [vmem:[%s0 + $0x90] sm:$0xf]
  %v55 = vld [vmem:[%s0 + $0x94] sm:$0xf]
  %v56 = vld [vmem:[%s0 + $0x98] sm:$0xf]
  %v57 = vld [vmem:[%s0 + $0x9c] sm:$0xf]
  %v58 = vld [vmem:[%s0 + $0xa0] sm:$0xf]
  %v59 = vld [vmem:[%s0 + $0xa4] sm:$0xf]
  %v60 = vld [vmem:[%s0 + $0xa8] sm:$0xf]
  %v61 = vld [vmem:[%s0 + $0xac] sm:$0xf]
  %v62 = vld [vmem:[%s0 + $0xb0] sm:$0xf]
  %v63 = vld [vmem:[%s0 + $0xb4] sm:$0xf]
  %v64 = vld [vmem:[%s0 + $0xb8] sm:$0xf]
  %v65 = vld [vmem:[%s0 + $0xbc] sm:$0xf]
  %v66 = vld [vmem:[%s0 + $0xc0] sm:$0xf]
  %v67 = vld [vmem:[%s0 + $0xc4] sm:$0xf]
  %v68 = vld [vmem:[%s0 + $0xc8] sm:$0xf]
  %v69 = vld [vmem:[%s0 + $0xcc] sm:$0xf]
  %v70 = vld [vmem:[%s0 + $0xd0] sm:$0xf]
  %v71 = vld [vmem:[%s0 + $0xd4] sm:$0xf]
  %v72 = vld [vmem:[%s0 + $0xd8] sm:$0xf]
  %v73 = vld [vmem:[%s0 + $0xdc] sm:$0xf]
  %v74 = vld [vmem:[%s0 + $0xe0] sm:$0xf]
  %v75 = vld [vmem:[%s0 + $0xe4] sm:$0xf]
  %v76 = vld [vmem:[%s0 + $0xe8] sm:$0xf]
  %v77 = vld [vmem:[%s0 + $0xec] sm:$0xf]
  %v78 = vld [vmem:[%s0 + $0xf0] sm:$0xf]
  %v79 = vld [vmem:[%s0 + $0xf4] sm:$0xf]
  %v80 = vld [vmem:[%s0 + $0xf8] sm:$0xf]
  %v81 = vld [vmem:[%s0 + $0xfc] sm:$0xf]
  %v82 = vld [vmem:[%s0 + $0x100] sm:$0xf]
  %v83 = vld [vmem:[%s0 + $0x104] sm:$0xf]
  %v84 = vld [vmem:[%s0 + $0x108] sm:$0xf]
  %v85 = vld [vmem:[%s0 + $0x10c] sm:$0xf]
  %v86 = vld [vmem:[%s0 + $0x110] sm:$0xf]
  %v87 = vld [vmem:[%s0 + $0x114] sm:$0xf]
  %v88 = vld [vmem:[%s0 + $0x118] sm:$0xf]
  %v89 = vld [vmem:[%s0 + $0x11c] sm:$0xf]
  %v90 = vld [vmem:[%s0 + $0x120] sm:$0xf]
  %v91 = vld [vmem:[%s0 + $0x124] sm:$0xf]
  %v92 = vld [vmem:[%s0 + $0x128] sm:$0xf]
  %v93 = vld [vmem:[%s0 + $0x12c] sm:$0xf]
  %v94 = vld [vmem:[%s0 + $0x130] sm:$0xf]
  %v95 = vld [vmem:[%s0 + $0x134] sm:$0xf]
  %v96 = vld [vmem:[%s0 + $0x138] sm:$0xf]
  %v97 = vld [vmem:[%s0 + $0x13c] sm:$0xf]
  %v98 = vld [vmem:[%s0 + $0x140] sm:$0xf]
  %v99 = vld [vmem:[%s0 + $0x144] sm:$0xf]
  %v100 = vld [vmem:[%s0 + $0x148] sm:$0xf]
  %v101 = vld [vmem:[%s0 + $0x14c] sm:$0xf]
  %v102 = vld [vmem:[%s0 + $0x150] sm:$0xf]
  %v103 = vld [vmem:[%s0 + $0x154] sm:$0xf]
  %v104 = vld [vmem:[%s0 + $0x158] sm:$0xf]
  %v105 = vld [vmem:[%s0 + $0x15c] sm:$0xf]
  %v106 = vld [vmem:[%s0 + $0x160] sm:$0xf]
  %v107 = vld [vmem:[%s0 + $0x164] sm:$0xf]
  %v108 = vld [vmem:[%s0 + $0x168] sm:$0xf]
  %v109 = vld [vmem:[%s0 + $0x16c] sm:$0xf]
  %v110 = vld [vmem:[%s0 + $0x170] sm:$0xf]
  %v111 = vld [vmem:[%s0 + $0x174] sm:$0xf]
  %v112 = vld [vmem:[%s0 + $0x178] sm:$0xf]
  %v113 = vld [vmem:[%s0 + $0x17c] sm:$0xf]
  %v114 = vld [vmem:[%s0 + $0x180] sm:$0xf]
  %v115 = vld [vmem:[%s0 + $0x184] sm:$0xf]
  %v116 = vld [vmem:[%s0 + $0x188] sm:$0xf]
  %v117 = vld [vmem:[%s0 + $0x18c] sm:$0xf]
  %v118 = vld [vmem:[%s0 + $0x190] sm:$0xf]
  %v119 = vld [vmem:[%s0 + $0x194] sm:$0xf]
  %v120 = vld [vmem:[%s0 + $0x198] sm:$0xf]
  %v121 = vld [vmem:[%s0 + $0x19c] sm:$0xf]
  %v122 = vld [vmem:[%s0 + $0x1a0] sm:$0xf]
  %v123 = vld [vmem:[%s0 + $0x1a4] sm:$0xf]
  %v124 = vld [vmem:[%s0 + $0x1a8] sm:$0xf]
  %v125 = vld [vmem:[%s0 + $0x1ac] sm:$0xf]
  %v126 = vld [vmem:[%s0 + $0x1b0] sm:$0xf]
  %v127 = vld [vmem:[%s0 + $0x1b4] sm:$0xf]
  %v128 = vld [vmem:[%s0 + $0x1b8] sm:$0xf]
  %v129 = vld [vmem:[%s0 + $0x1bc] sm:$0xf]
  %v130 = vld [vmem:[%s0 + $0x1c0] sm:$0xf]
  %v131 = vld [vmem:[%s0 + $0x1c4] sm:$0xf]
  %v132 = vld [vmem:[%s0 + $0x1c8] sm:$0xf]
  %v133 = vld [vmem:[%s0 + $0x1cc] sm:$0xf]
  %v134 = vld [vmem:[%s0 + $0x1d0] sm:$0xf]
  %v135 = vld [vmem:[%s0 + $0x1d4] sm:$0xf]
  %v136 = vld [vmem:[%s0 + $0x1d8] sm:$0xf]
  %v137 = vld [vmem:[%s0 + $0x1dc] sm:$0xf]
  %v138 = vld [vmem:[%s0 + $0x1e0] sm:$0xf]
  %v139 = vld [vmem:[%s0 + $0x1e4] sm:$0xf]
  %v140 = vld [vmem:[%s0 + $0x1e8] sm:$0xf]
  %v141 = vld [vmem:[%s0 + $0x1ec] sm:$0xf]
  %v142 = vld [vmem:[%s0 + $0x1f0] sm:$0xf]
  %v143 = vld [vmem:[%s0 + $0x1f4] sm:$0xf]
  %v144 = vld [vmem:[%s0 + $0x1f8] sm:$0xf]
  %v145 = vld [vmem:[%s0 + $0x1fc] sm:$0xf]
  %v146 = vld [vmem:[%s1] sm:$0x3]
  %v275 = vunpack.c.l.b16 %v18
  %v276 = vunpack.c.l.b16 %v19
  %v277 = vunpack.c.l.b16 %v20
  %v278 = vunpack.c.l.b16 %v21
  %v279 = vunpack.c.l.b16 %v22
  %v280 = vunpack.c.l.b16 %v23
  %v281 = vunpack.c.l.b16 %v24
  %v282 = vunpack.c.l.b16 %v25
  %v283 = vunpack.c.l.b16 %v26
  %v284 = vunpack.c.l.b16 %v27
  %v285 = vunpack.c.l.b16 %v28
  %v286 = vunpack.c.l.b16 %v29
  %v287 = vunpack.c.l.b16 %v30
  %v288 = vunpack.c.l.b16 %v31
  %v289 = vunpack.c.l.b16 %v32
  %v290 = vunpack.c.l.b16 %v33
  %v291 = vunpack.c.l.b16 %v34
  %v292 = vunpack.c.l.b16 %v35
  %v293 = vunpack.c.l.b16 %v36
  %v294 = vunpack.c.l.b16 %v37
  %v295 = vunpack.c.l.b16 %v38
  %v296 = vunpack.c.l.b16 %v39
  %v297 = vunpack.c.l.b16 %v40
  %v298 = vunpack.c.l.b16 %v41
  %v299 = vunpack.c.l.b16 %v42
  %v300 = vunpack.c.l.b16 %v43
  %v301 = vunpack.c.l.b16 %v44
  %v302 = vunpack.c.l.b16 %v45
  %v303 = vunpack.c.l.b16 %v46
  %v304 = vunpack.c.l.b16 %v47
  %v305 = vunpack.c.l.b16 %v48
  %v306 = vunpack.c.l.b16 %v49
  %v307 = vunpack.c.l.b16 %v50
  %v308 = vunpack.c.l.b16 %v51
  %v309 = vunpack.c.l.b16 %v52
  %v310 = vunpack.c.l.b16 %v53
  %v311 = vunpack.c.l.b16 %v54
  %v312 = vunpack.c.l.b16 %v55
  %v313 = vunpack.c.l.b16 %v56
  %v314 = vunpack.c.l.b16 %v57
  %v315 = vunpack.c.l.b16 %v58
  %v316 = vunpack.c.l.b16 %v59
  %v317 = vunpack.c.l.b16 %v60
  %v318 = vunpack.c.l.b16 %v61
  %v319 = vunpack.c.l.b16 %v62
  %v320 = vunpack.c.l.b16 %v63
  %v321 = vunpack.c.l.b16 %v64
  %v322 = vunpack.c.l.b16 %v65
  %v323 = vunpack.c.l.b16 %v66
  %v324 = vunpack.c.l.b16 %v67
  %v325 = vunpack.c.l.b16 %v68
  %v326 = vunpack.c.l.b16 %v69
  %v327 = vunpack.c.l.b16 %v70
  %v328 = vunpack.c.l.b16 %v71
  %v329 = vunpack.c.l.b16 %v72
  %v330 = vunpack.c.l.b16 %v73
  %v331 = vunpack.c.l.b16 %v74
  %v332 = vunpack.c.l.b16 %v75
  %v333 = vunpack.c.l.b16 %v76
  %v334 = vunpack.c.l.b16 %v77
  %v335 = vunpack.c.l.b16 %v78
  %v336 = vunpack.c.l.b16 %v79
  %v337 = vunpack.c.l.b16 %v80
  %v338 = vunpack.c.l.b16 %v81
  %v339 = vunpack.c.l.b16 %v82
  %v340 = vunpack.c.l.b16 %v83
  %v341 = vunpack.c.l.b16 %v84
  %v342 = vunpack.c.l.b16 %v85
  %v343 = vunpack.c.l.b16 %v86
  %v344 = vunpack.c.l.b16 %v87
  %v345 = vunpack.c.l.b16 %v88
  %v346 = vunpack.c.l.b16 %v89
  %v347 = vunpack.c.l.b16 %v90
  %v348 = vunpack.c.l.b16 %v91
  %v349 = vunpack.c.l.b16 %v92
  %v350 = vunpack.c.l.b16 %v93
  %v351 = vunpack.c.l.b16 %v94
  %v352 = vunpack.c.l.b16 %v95
  %v353 = vunpack.c.l.b16 %v96
  %v354 = vunpack.c.l.b16 %v97
  %v355 = vunpack.c.l.b16 %v98
  %v356 = vunpack.c.l.b16 %v99
  %v357 = vunpack.c.l.b16 %v100
  %v358 = vunpack.c.l.b16 %v101
  %v359 = vunpack.c.l.b16 %v102
  %v360 = vunpack.c.l.b16 %v103
  %v361 = vunpack.c.l.b16 %v104
  %v362 = vunpack.c.l.b16 %v105
  %v363 = vunpack.c.l.b16 %v106
  %v364 = vunpack.c.l.b16 %v107
  %v365 = vunpack.c.l.b16 %v108
  %v366 = vunpack.c.l.b16 %v109
  %v367 = vunpack.c.l.b16 %v110
  %v368 = vunpack.c.l.b16 %v111
  %v369 = vunpack.c.l.b16 %v112
  %v370 = vunpack.c.l.b16 %v113
  %v371 = vunpack.c.l.b16 %v114
  %v372 = vunpack.c.l.b16 %v115
  %v373 = vunpack.c.l.b16 %v116
  %v374 = vunpack.c.l.b16 %v117
  %v375 = vunpack.c.l.b16 %v118
  %v376 = vunpack.c.l.b16 %v119
  %v377 = vunpack.c.l.b16 %v120
  %v378 = vunpack.c.l.b16 %v121
  %v379 = vunpack.c.l.b16 %v122
  %v380 = vunpack.c.l.b16 %v123
  %v381 = vunpack.c.l.b16 %v124
  %v382 = vunpack.c.l.b16 %v125
  %v383 = vunpack.c.l.b16 %v126
  %v384 = vunpack.c.l.b16 %v127
  %v385 = vunpack.c.l.b16 %v128
  %v386 = vunpack.c.l.b16 %v129
  %v387 = vunpack.c.l.b16 %v130
  %v388 = vunpack.c.l.b16 %v131
  %v389 = vunpack.c.l.b16 %v132
  %v390 = vunpack.c.l.b16 %v133
  %v391 = vunpack.c.l.b16 %v134
  %v392 = vunpack.c.l.b16 %v135
  %v393 = vunpack.c.l.b16 %v136
  %v394 = vunpack.c.l.b16 %v137
  %v395 = vunpack.c.l.b16 %v138
  %v396 = vunpack.c.l.b16 %v139
  %v397 = vunpack.c.l.b16 %v140
  %v398 = vunpack.c.l.b16 %v141
  %v399 = vunpack.c.l.b16 %v142
  %v400 = vunpack.c.l.b16 %v143
  %v401 = vunpack.c.l.b16 %v144
  %v402 = vunpack.c.l.b16 %v145
  %v403 = vpack.c.b16 %v276, %v275
  %v404 = vpack.c.b16 %v278, %v277
  %v405 = vpack.c.b16 %v280, %v279
  %v406 = vpack.c.b16 %v282, %v281
  %v407 = vpack.c.b16 %v284, %v283
  %v408 = vpack.c.b16 %v286, %v285
  %v409 = vpack.c.b16 %v288, %v287
  %v410 = vpack.c.b16 %v290, %v289
  %v411 = vpack.c.b16 %v292, %v291
  %v412 = vpack.c.b16 %v294, %v293
  %v413 = vpack.c.b16 %v296, %v295
  %v414 = vpack.c.b16 %v298, %v297
  %v415 = vpack.c.b16 %v300, %v299
  %v416 = vpack.c.b16 %v302, %v301
  %v417 = vpack.c.b16 %v304, %v303
  %v418 = vpack.c.b16 %v306, %v305
  %v419 = vpack.c.b16 %v308, %v307
  %v420 = vpack.c.b16 %v310, %v309
  %v421 = vpack.c.b16 %v312, %v311
  %v422 = vpack.c.b16 %v314, %v313
  %v423 = vpack.c.b16 %v316, %v315
  %v424 = vpack.c.b16 %v318, %v317
  %v425 = vpack.c.b16 %v320, %v319
  %v426 = vpack.c.b16 %v322, %v321
  %v427 = vpack.c.b16 %v324, %v323
  %v428 = vpack.c.b16 %v326, %v325
  %v429 = vpack.c.b16 %v328, %v327
  %v430 = vpack.c.b16 %v330, %v329
  %v431 = vpack.c.b16 %v332, %v331
  %v432 = vpack.c.b16 %v334, %v333
  %v433 = vpack.c.b16 %v336, %v335
  %v434 = vpack.c.b16 %v338, %v337
  %v435 = vpack.c.b16 %v340, %v339
  %v436 = vpack.c.b16 %v342, %v341
  %v437 = vpack.c.b16 %v344, %v343
  %v438 = vpack.c.b16 %v346, %v345
  %v439 = vpack.c.b16 %v348, %v347
  %v440 = vpack.c.b16 %v350, %v349
  %v441 = vpack.c.b16 %v352, %v351
  %v442 = vpack.c.b16 %v354, %v353
  %v443 = vpack.c.b16 %v356, %v355
  %v444 = vpack.c.b16 %v358, %v357
  %v445 = vpack.c.b16 %v360, %v359
  %v446 = vpack.c.b16 %v362, %v361
  %v447 = vpack.c.b16 %v364, %v363
  %v448 = vpack.c.b16 %v366, %v365
  %v449 = vpack.c.b16 %v368, %v367
  %v450 = vpack.c.b16 %v370, %v369
  %v451 = vpack.c.b16 %v372, %v371
  %v452 = vpack.c.b16 %v374, %v373
  %v453 = vpack.c.b16 %v376, %v375
  %v454 = vpack.c.b16 %v378, %v377
  %v455 = vpack.c.b16 %v380, %v379
  %v456 = vpack.c.b16 %v382, %v381
  %v457 = vpack.c.b16 %v384, %v383
  %v458 = vpack.c.b16 %v386, %v385
  %v459 = vpack.c.b16 %v388, %v387
  %v460 = vpack.c.b16 %v390, %v389
  %v461 = vpack.c.b16 %v392, %v391
  %v462 = vpack.c.b16 %v394, %v393
  %v463 = vpack.c.b16 %v396, %v395
  %v464 = vpack.c.b16 %v398, %v397
  %v465 = vpack.c.b16 %v400, %v399
  %v466 = vpack.c.b16 %v402, %v401
  %vm467 = vcmask 31744
  %v469 = vsel %vm467, %v403, 0
  %v472 = vsel %vm467, %v404, 0
  %v475 = vsel %vm467, %v405, 0
  %v478 = vsel %vm467, %v406, 0
  %v481 = vsel %vm467, %v407, 0
  %v484 = vsel %vm467, %v408, 0
  %v487 = vsel %vm467, %v409, 0
  %v490 = vsel %vm467, %v410, 0
  %v493 = vsel %vm467, %v411, 0
  %v496 = vsel %vm467, %v412, 0
  %v499 = vsel %vm467, %v413, 0
  %v502 = vsel %vm467, %v414, 0
  %v505 = vsel %vm467, %v415, 0
  %v508 = vsel %vm467, %v416, 0
  %v511 = vsel %vm467, %v417, 0
  %v514 = vsel %vm467, %v418, 0
  %v517 = vsel %vm467, %v419, 0
  %v520 = vsel %vm467, %v420, 0
  %v523 = vsel %vm467, %v421, 0
  %v526 = vsel %vm467, %v422, 0
  %v529 = vsel %vm467, %v423, 0
  %v532 = vsel %vm467, %v424, 0
  %v535 = vsel %vm467, %v425, 0
  %v538 = vsel %vm467, %v426, 0
  %v541 = vsel %vm467, %v427, 0
  %v544 = vsel %vm467, %v428, 0
  %v547 = vsel %vm467, %v429, 0
  %v550 = vsel %vm467, %v430, 0
  %v553 = vsel %vm467, %v431, 0
  %v556 = vsel %vm467, %v432, 0
  %v559 = vsel %vm467, %v433, 0
  %v562 = vsel %vm467, %v434, 0
  %v565 = vsel %vm467, %v435, 0
  %v568 = vsel %vm467, %v436, 0
  %v571 = vsel %vm467, %v437, 0
  %v574 = vsel %vm467, %v438, 0
  %v577 = vsel %vm467, %v439, 0
  %v580 = vsel %vm467, %v440, 0
  %v583 = vsel %vm467, %v441, 0
  %v586 = vsel %vm467, %v442, 0
  %v589 = vsel %vm467, %v443, 0
  %v592 = vsel %vm467, %v444, 0
  %v595 = vsel %vm467, %v445, 0
  %v598 = vsel %vm467, %v446, 0
  %v601 = vsel %vm467, %v447, 0
  %v604 = vsel %vm467, %v448, 0
  %v607 = vsel %vm467, %v449, 0
  %v610 = vsel %vm467, %v450, 0
  %v613 = vsel %vm467, %v451, 0
  %v616 = vsel %vm467, %v452, 0
  %v619 = vsel %vm467, %v453, 0
  %v622 = vsel %vm467, %v454, 0
  %v625 = vsel %vm467, %v455, 0
  %v628 = vsel %vm467, %v456, 0
  %v631 = vsel %vm467, %v457, 0
  %v634 = vsel %vm467, %v458, 0
  %v637 = vsel %vm467, %v459, 0
  %v640 = vsel %vm467, %v460, 0
  %v643 = vsel %vm467, %v461, 0
  %v646 = vsel %vm467, %v462, 0
  %v649 = vsel %vm467, %v463, 0
  %v652 = vsel %vm467, %v464, 0
  %v655 = vsel %vm467, %v465, 0
  %v658 = vsel %vm467, %v466, 0
  %vm660 = vcmask 1041408
  %v662 = vsel %vm660, %v146, 0
  %664 = vmatprep.subr.bf16.mxu0 0
  %665 = vmatpush1.bf16.msra.mxu0 0
  %666 = vmatprep.subr.bf16.mxu0 0
  %667 = vmatpush1.bf16.msra.mxu0 0
  %668 = vmatprep.subr.bf16.mxu0 0
  %669 = vmatpush1.bf16.msra.mxu0 0
  %670 = vmatprep.subr.bf16.mxu0 0
  %671 = vmatpush1.bf16.msra.mxu0 0
  %672 = vmatprep.subr.bf16.mxu0 0
  %673 = vmatpush1.bf16.msra.mxu0 0
  %674 = vmatprep.subr.bf16.mxu0 0
  %675 = vmatpush1.bf16.msra.mxu0 0
  %676 = vmatprep.subr.bf16.mxu0 0
  %677 = vmatpush1.bf16.msra.mxu0 0
  %678 = vmatprep.subr.bf16.mxu0 0
  %679 = vmatpush1.bf16.msra.mxu0 %v662
  %680 = vmatprep.subr.bf16.mxu0 0
  %681 = vmatpush2.bf16.msra.mxu0 0
  %682 = vmatprep.subr.bf16.mxu0 0
  %683 = vmatpush2.bf16.msra.mxu0 0
  %684 = vmatprep.subr.bf16.mxu0 0
  %685 = vmatpush2.bf16.msra.mxu0 0
  %686 = vmatprep.subr.bf16.mxu0 0
  %687 = vmatpush2.bf16.msra.mxu0 0
  %688 = vmatprep.subr.bf16.mxu0 0
  %689 = vmatpush2.bf16.msra.mxu0 0
  %690 = vmatprep.subr.bf16.mxu0 0
  %691 = vmatpush2.bf16.msra.mxu0 0
  %692 = vmatprep.subr.bf16.mxu0 0
  %693 = vmatpush2.bf16.msra.mxu0 0
  %694 = vmatprep.subr.bf16.mxu0 0
  %695 = vmatpush2.bf16.msra.mxu0 0
  %696 = vmatprep.mubr.bf16.mxu0 0
  %697 = vmatmul.mubr.bf16.gmra.mxu0 %v469
  %v698 = vpop.f32.mrf.mxu0
  %v699 = vadd.f32 0.0, %v698
  %v700 = vpop.f32.mrf.mxu0
  %v701 = vpop.f32.mrf.mxu0
  %v702 = vadd.f32 0.0, %v701
  %v703 = vpop.f32.mrf.mxu0
  %704 = vmatprep.mubr.bf16.mxu0 0
  %705 = vmatmul.mubr.bf16.gmra.mxu0 %v472
  %v706 = vpop.f32.mrf.mxu0
  %v707 = vadd.f32 0.0, %v706
  %v708 = vpop.f32.mrf.mxu0
  %v709 = vpop.f32.mrf.mxu0
  %v710 = vadd.f32 0.0, %v709
  %v711 = vpop.f32.mrf.mxu0
  %712 = vmatprep.mubr.bf16.mxu0 0
  %713 = vmatmul.mubr.bf16.gmra.mxu0 %v475
  %v714 = vpop.f32.mrf.mxu0
  %v715 = vadd.f32 0.0, %v714
  %v716 = vpop.f32.mrf.mxu0
  %v717 = vpop.f32.mrf.mxu0
  %v718 = vadd.f32 0.0, %v717
  %v719 = vpop.f32.mrf.mxu0
  %720 = vmatprep.mubr.bf16.mxu0 0
  %721 = vmatmul.mubr.bf16.gmra.mxu0 %v478
  %v722 = vpop.f32.mrf.mxu0
  %v723 = vadd.f32 0.0, %v722
  %v724 = vpop.f32.mrf.mxu0
  %v725 = vpop.f32.mrf.mxu0
  %v726 = vadd.f32 0.0, %v725
  %v727 = vpop.f32.mrf.mxu0
  %728 = vmatprep.mubr.bf16.mxu0 0
  %729 = vmatmul.mubr.bf16.gmra.mxu0 %v481
  %v730 = vpop.f32.mrf.mxu0
  %v731 = vadd.f32 0.0, %v730
  %v732 = vpop.f32.mrf.mxu0
  %v733 = vpop.f32.mrf.mxu0
  %v734 = vadd.f32 0.0, %v733
  %v735 = vpop.f32.mrf.mxu0
  %736 = vmatprep.mubr.bf16.mxu0 0
  %737 = vmatmul.mubr.bf16.gmra.mxu0 %v484
  %v738 = vpop.f32.mrf.mxu0
  %v739 = vadd.f32 0.0, %v738
  %v740 = vpop.f32.mrf.mxu0
  %v741 = vpop.f32.mrf.mxu0
  %v742 = vadd.f32 0.0, %v741
  %v743 = vpop.f32.mrf.mxu0
  %744 = vmatprep.mubr.bf16.mxu0 0
  %745 = vmatmul.mubr.bf16.gmra.mxu0 %v487
  %v746 = vpop.f32.mrf.mxu0
  %v747 = vadd.f32 0.0, %v746
  %v748 = vpop.f32.mrf.mxu0
  %v749 = vpop.f32.mrf.mxu0
  %v750 = vadd.f32 0.0, %v749
  %v751 = vpop.f32.mrf.mxu0
  %752 = vmatprep.mubr.bf16.mxu0 0
  %753 = vmatmul.mubr.bf16.gmra.mxu0 %v490
  %v754 = vpop.f32.mrf.mxu0
  %v755 = vadd.f32 0.0, %v754
  %v756 = vpop.f32.mrf.mxu0
  %v757 = vpop.f32.mrf.mxu0
  %v758 = vadd.f32 0.0, %v757
  %v759 = vpop.f32.mrf.mxu0
  %760 = vmatprep.mubr.bf16.mxu0 0
  %761 = vmatmul.mubr.bf16.gmra.mxu0 %v493
  %v762 = vpop.f32.mrf.mxu0
  %v763 = vadd.f32 0.0, %v762
  %v764 = vpop.f32.mrf.mxu0
  %v765 = vpop.f32.mrf.mxu0
  %v766 = vadd.f32 0.0, %v765
  %v767 = vpop.f32.mrf.mxu0
  %768 = vmatprep.mubr.bf16.mxu0 0
  %769 = vmatmul.mubr.bf16.gmra.mxu0 %v496
  %v770 = vpop.f32.mrf.mxu0
  %v771 = vadd.f32 0.0, %v770
  %v772 = vpop.f32.mrf.mxu0
  %v773 = vpop.f32.mrf.mxu0
  %v774 = vadd.f32 0.0, %v773
  %v775 = vpop.f32.mrf.mxu0
  %776 = vmatprep.mubr.bf16.mxu0 0
  %777 = vmatmul.mubr.bf16.gmra.mxu0 %v499
  %v778 = vpop.f32.mrf.mxu0
  %v779 = vadd.f32 0.0, %v778
  %v780 = vpop.f32.mrf.mxu0
  %v781 = vpop.f32.mrf.mxu0
  %v782 = vadd.f32 0.0, %v781
  %v783 = vpop.f32.mrf.mxu0
  %784 = vmatprep.mubr.bf16.mxu0 0
  %785 = vmatmul.mubr.bf16.gmra.mxu0 %v502
  %v786 = vpop.f32.mrf.mxu0
  %v787 = vadd.f32 0.0, %v786
  %v788 = vpop.f32.mrf.mxu0
  %v789 = vpop.f32.mrf.mxu0
  %v790 = vadd.f32 0.0, %v789
  %v791 = vpop.f32.mrf.mxu0
  %792 = vmatprep.mubr.bf16.mxu0 0
  %793 = vmatmul.mubr.bf16.gmra.mxu0 %v505
  %v794 = vpop.f32.mrf.mxu0
  %v795 = vadd.f32 0.0, %v794
  %v796 = vpop.f32.mrf.mxu0
  %v797 = vpop.f32.mrf.mxu0
  %v798 = vadd.f32 0.0, %v797
  %v799 = vpop.f32.mrf.mxu0
  %800 = vmatprep.mubr.bf16.mxu0 0
  %801 = vmatmul.mubr.bf16.gmra.mxu0 %v508
  %v802 = vpop.f32.mrf.mxu0
  %v803 = vadd.f32 0.0, %v802
  %v804 = vpop.f32.mrf.mxu0
  %v805 = vpop.f32.mrf.mxu0
  %v806 = vadd.f32 0.0, %v805
  %v807 = vpop.f32.mrf.mxu0
  %808 = vmatprep.mubr.bf16.mxu0 0
  %809 = vmatmul.mubr.bf16.gmra.mxu0 %v511
  %v810 = vpop.f32.mrf.mxu0
  %v811 = vadd.f32 0.0, %v810
  %v812 = vpop.f32.mrf.mxu0
  %v813 = vpop.f32.mrf.mxu0
  %v814 = vadd.f32 0.0, %v813
  %v815 = vpop.f32.mrf.mxu0
  %816 = vmatprep.mubr.bf16.mxu0 0
  %817 = vmatmul.mubr.bf16.gmra.mxu0 %v514
  %v818 = vpop.f32.mrf.mxu0
  %v819 = vadd.f32 0.0, %v818
  %v820 = vpop.f32.mrf.mxu0
  %v821 = vpop.f32.mrf.mxu0
  %v822 = vadd.f32 0.0, %v821
  %v823 = vpop.f32.mrf.mxu0
  %824 = vmatprep.mubr.bf16.mxu0 0
  %825 = vmatmul.mubr.bf16.gmra.mxu0 %v517
  %v826 = vpop.f32.mrf.mxu0
  %v827 = vadd.f32 0.0, %v826
  %v828 = vpop.f32.mrf.mxu0
  %v829 = vpop.f32.mrf.mxu0
  %v830 = vadd.f32 0.0, %v829
  %v831 = vpop.f32.mrf.mxu0
  %832 = vmatprep.mubr.bf16.mxu0 0
  %833 = vmatmul.mubr.bf16.gmra.mxu0 %v520
  %v834 = vpop.f32.mrf.mxu0
  %v835 = vadd.f32 0.0, %v834
  %v836 = vpop.f32.mrf.mxu0
  %v837 = vpop.f32.mrf.mxu0
  %v838 = vadd.f32 0.0, %v837
  %v839 = vpop.f32.mrf.mxu0
  %840 = vmatprep.mubr.bf16.mxu0 0
  %841 = vmatmul.mubr.bf16.gmra.mxu0 %v523
  %v842 = vpop.f32.mrf.mxu0
  %v843 = vadd.f32 0.0, %v842
  %v844 = vpop.f32.mrf.mxu0
  %v845 = vpop.f32.mrf.mxu0
  %v846 = vadd.f32 0.0, %v845
  %v847 = vpop.f32.mrf.mxu0
  %848 = vmatprep.mubr.bf16.mxu0 0
  %849 = vmatmul.mubr.bf16.gmra.mxu0 %v526
  %v850 = vpop.f32.mrf.mxu0
  %v851 = vadd.f32 0.0, %v850
  %v852 = vpop.f32.mrf.mxu0
  %v853 = vpop.f32.mrf.mxu0
  %v854 = vadd.f32 0.0, %v853
  %v855 = vpop.f32.mrf.mxu0
  %856 = vmatprep.mubr.bf16.mxu0 0
  %857 = vmatmul.mubr.bf16.gmra.mxu0 %v529
  %v858 = vpop.f32.mrf.mxu0
  %v859 = vadd.f32 0.0, %v858
  %v860 = vpop.f32.mrf.mxu0
  %v861 = vpop.f32.mrf.mxu0
  %v862 = vadd.f32 0.0, %v861
  %v863 = vpop.f32.mrf.mxu0
  %864 = vmatprep.mubr.bf16.mxu0 0
  %865 = vmatmul.mubr.bf16.gmra.mxu0 %v532
  %v866 = vpop.f32.mrf.mxu0
  %v867 = vadd.f32 0.0, %v866
  %v868 = vpop.f32.mrf.mxu0
  %v869 = vpop.f32.mrf.mxu0
  %v870 = vadd.f32 0.0, %v869
  %v871 = vpop.f32.mrf.mxu0
  %872 = vmatprep.mubr.bf16.mxu0 0
  %873 = vmatmul.mubr.bf16.gmra.mxu0 %v535
  %v874 = vpop.f32.mrf.mxu0
  %v875 = vadd.f32 0.0, %v874
  %v876 = vpop.f32.mrf.mxu0
  %v877 = vpop.f32.mrf.mxu0
  %v878 = vadd.f32 0.0, %v877
  %v879 = vpop.f32.mrf.mxu0
  %880 = vmatprep.mubr.bf16.mxu0 0
  %881 = vmatmul.mubr.bf16.gmra.mxu0 %v538
  %v882 = vpop.f32.mrf.mxu0
  %v883 = vadd.f32 0.0, %v882
  %v884 = vpop.f32.mrf.mxu0
  %v885 = vpop.f32.mrf.mxu0
  %v886 = vadd.f32 0.0, %v885
  %v887 = vpop.f32.mrf.mxu0
  %888 = vmatprep.mubr.bf16.mxu0 0
  %889 = vmatmul.mubr.bf16.gmra.mxu0 %v541
  %v890 = vpop.f32.mrf.mxu0
  %v891 = vadd.f32 0.0, %v890
  %v892 = vpop.f32.mrf.mxu0
  %v893 = vpop.f32.mrf.mxu0
  %v894 = vadd.f32 0.0, %v893
  %v895 = vpop.f32.mrf.mxu0
  %896 = vmatprep.mubr.bf16.mxu0 0
  %897 = vmatmul.mubr.bf16.gmra.mxu0 %v544
  %v898 = vpop.f32.mrf.mxu0
  %v899 = vadd.f32 0.0, %v898
  %v900 = vpop.f32.mrf.mxu0
  %v901 = vpop.f32.mrf.mxu0
  %v902 = vadd.f32 0.0, %v901
  %v903 = vpop.f32.mrf.mxu0
  %904 = vmatprep.mubr.bf16.mxu0 0
  %905 = vmatmul.mubr.bf16.gmra.mxu0 %v547
  %v906 = vpop.f32.mrf.mxu0
  %v907 = vadd.f32 0.0, %v906
  %v908 = vpop.f32.mrf.mxu0
  %v909 = vpop.f32.mrf.mxu0
  %v910 = vadd.f32 0.0, %v909
  %v911 = vpop.f32.mrf.mxu0
  %912 = vmatprep.mubr.bf16.mxu0 0
  %913 = vmatmul.mubr.bf16.gmra.mxu0 %v550
  %v914 = vpop.f32.mrf.mxu0
  %v915 = vadd.f32 0.0, %v914
  %v916 = vpop.f32.mrf.mxu0
  %v917 = vpop.f32.mrf.mxu0
  %v918 = vadd.f32 0.0, %v917
  %v919 = vpop.f32.mrf.mxu0
  %920 = vmatprep.mubr.bf16.mxu0 0
  %921 = vmatmul.mubr.bf16.gmra.mxu0 %v553
  %v922 = vpop.f32.mrf.mxu0
  %v923 = vadd.f32 0.0, %v922
  %v924 = vpop.f32.mrf.mxu0
  %v925 = vpop.f32.mrf.mxu0
  %v926 = vadd.f32 0.0, %v925
  %v927 = vpop.f32.mrf.mxu0
  %928 = vmatprep.mubr.bf16.mxu0 0
  %929 = vmatmul.mubr.bf16.gmra.mxu0 %v556
  %v930 = vpop.f32.mrf.mxu0
  %v931 = vadd.f32 0.0, %v930
  %v932 = vpop.f32.mrf.mxu0
  %v933 = vpop.f32.mrf.mxu0
  %v934 = vadd.f32 0.0, %v933
  %v935 = vpop.f32.mrf.mxu0
  %936 = vmatprep.mubr.bf16.mxu0 0
  %937 = vmatmul.mubr.bf16.gmra.mxu0 %v559
  %v938 = vpop.f32.mrf.mxu0
  %v939 = vadd.f32 0.0, %v938
  %v940 = vpop.f32.mrf.mxu0
  %v941 = vpop.f32.mrf.mxu0
  %v942 = vadd.f32 0.0, %v941
  %v943 = vpop.f32.mrf.mxu0
  %944 = vmatprep.mubr.bf16.mxu0 0
  %945 = vmatmul.mubr.bf16.gmra.mxu0 %v562
  %v946 = vpop.f32.mrf.mxu0
  %v947 = vadd.f32 0.0, %v946
  %v948 = vpop.f32.mrf.mxu0
  %v949 = vpop.f32.mrf.mxu0
  %v950 = vadd.f32 0.0, %v949
  %v951 = vpop.f32.mrf.mxu0
  %952 = vmatprep.mubr.bf16.mxu0 0
  %953 = vmatmul.mubr.bf16.gmra.mxu0 %v565
  %v954 = vpop.f32.mrf.mxu0
  %v955 = vadd.f32 0.0, %v954
  %v956 = vpop.f32.mrf.mxu0
  %v957 = vpop.f32.mrf.mxu0
  %v958 = vadd.f32 0.0, %v957
  %v959 = vpop.f32.mrf.mxu0
  %960 = vmatprep.mubr.bf16.mxu0 0
  %961 = vmatmul.mubr.bf16.gmra.mxu0 %v568
  %v962 = vpop.f32.mrf.mxu0
  %v963 = vadd.f32 0.0, %v962
  %v964 = vpop.f32.mrf.mxu0
  %v965 = vpop.f32.mrf.mxu0
  %v966 = vadd.f32 0.0, %v965
  %v967 = vpop.f32.mrf.mxu0
  %968 = vmatprep.mubr.bf16.mxu0 0
  %969 = vmatmul.mubr.bf16.gmra.mxu0 %v571
  %v970 = vpop.f32.mrf.mxu0
  %v971 = vadd.f32 0.0, %v970
  %v972 = vpop.f32.mrf.mxu0
  %v973 = vpop.f32.mrf.mxu0
  %v974 = vadd.f32 0.0, %v973
  %v975 = vpop.f32.mrf.mxu0
  %976 = vmatprep.mubr.bf16.mxu0 0
  %977 = vmatmul.mubr.bf16.gmra.mxu0 %v574
  %v978 = vpop.f32.mrf.mxu0
  %v979 = vadd.f32 0.0, %v978
  %v980 = vpop.f32.mrf.mxu0
  %v981 = vpop.f32.mrf.mxu0
  %v982 = vadd.f32 0.0, %v981
  %v983 = vpop.f32.mrf.mxu0
  %984 = vmatprep.mubr.bf16.mxu0 0
  %985 = vmatmul.mubr.bf16.gmra.mxu0 %v577
  %v986 = vpop.f32.mrf.mxu0
  %v987 = vadd.f32 0.0, %v986
  %v988 = vpop.f32.mrf.mxu0
  %v989 = vpop.f32.mrf.mxu0
  %v990 = vadd.f32 0.0, %v989
  %v991 = vpop.f32.mrf.mxu0
  %992 = vmatprep.mubr.bf16.mxu0 0
  %993 = vmatmul.mubr.bf16.gmra.mxu0 %v580
  %v994 = vpop.f32.mrf.mxu0
  %v995 = vadd.f32 0.0, %v994
  %v996 = vpop.f32.mrf.mxu0
  %v997 = vpop.f32.mrf.mxu0
  %v998 = vadd.f32 0.0, %v997
  %v999 = vpop.f32.mrf.mxu0
  %1000 = vmatprep.mubr.bf16.mxu0 0
  %1001 = vmatmul.mubr.bf16.gmra.mxu0 %v583
  %v1002 = vpop.f32.mrf.mxu0
  %v1003 = vadd.f32 0.0, %v1002
  %v1004 = vpop.f32.mrf.mxu0
  %v1005 = vpop.f32.mrf.mxu0
  %v1006 = vadd.f32 0.0, %v1005
  %v1007 = vpop.f32.mrf.mxu0
  %1008 = vmatprep.mubr.bf16.mxu0 0
  %1009 = vmatmul.mubr.bf16.gmra.mxu0 %v586
  %v1010 = vpop.f32.mrf.mxu0
  %v1011 = vadd.f32 0.0, %v1010
  %v1012 = vpop.f32.mrf.mxu0
  %v1013 = vpop.f32.mrf.mxu0
  %v1014 = vadd.f32 0.0, %v1013
  %v1015 = vpop.f32.mrf.mxu0
  %1016 = vmatprep.mubr.bf16.mxu0 0
  %1017 = vmatmul.mubr.bf16.gmra.mxu0 %v589
  %v1018 = vpop.f32.mrf.mxu0
  %v1019 = vadd.f32 0.0, %v1018
  %v1020 = vpop.f32.mrf.mxu0
  %v1021 = vpop.f32.mrf.mxu0
  %v1022 = vadd.f32 0.0, %v1021
  %v1023 = vpop.f32.mrf.mxu0
  %1024 = vmatprep.mubr.bf16.mxu0 0
  %1025 = vmatmul.mubr.bf16.gmra.mxu0 %v592
  %v1026 = vpop.f32.mrf.mxu0
  %v1027 = vadd.f32 0.0, %v1026
  %v1028 = vpop.f32.mrf.mxu0
  %v1029 = vpop.f32.mrf.mxu0
  %v1030 = vadd.f32 0.0, %v1029
  %v1031 = vpop.f32.mrf.mxu0
  %1032 = vmatprep.mubr.bf16.mxu0 0
  %1033 = vmatmul.mubr.bf16.gmra.mxu0 %v595
  %v1034 = vpop.f32.mrf.mxu0
  %v1035 = vadd.f32 0.0, %v1034
  %v1036 = vpop.f32.mrf.mxu0
  %v1037 = vpop.f32.mrf.mxu0
  %v1038 = vadd.f32 0.0, %v1037
  %v1039 = vpop.f32.mrf.mxu0
  %1040 = vmatprep.mubr.bf16.mxu0 0
  %1041 = vmatmul.mubr.bf16.gmra.mxu0 %v598
  %v1042 = vpop.f32.mrf.mxu0
  %v1043 = vadd.f32 0.0, %v1042
  %v1044 = vpop.f32.mrf.mxu0
  %v1045 = vpop.f32.mrf.mxu0
  %v1046 = vadd.f32 0.0, %v1045
  %v1047 = vpop.f32.mrf.mxu0
  %1048 = vmatprep.mubr.bf16.mxu0 0
  %1049 = vmatmul.mubr.bf16.gmra.mxu0 %v601
  %v1050 = vpop.f32.mrf.mxu0
  %v1051 = vadd.f32 0.0, %v1050
  %v1052 = vpop.f32.mrf.mxu0
  %v1053 = vpop.f32.mrf.mxu0
  %v1054 = vadd.f32 0.0, %v1053
  %v1055 = vpop.f32.mrf.mxu0
  %1056 = vmatprep.mubr.bf16.mxu0 0
  %1057 = vmatmul.mubr.bf16.gmra.mxu0 %v604
  %v1058 = vpop.f32.mrf.mxu0
  %v1059 = vadd.f32 0.0, %v1058
  %v1060 = vpop.f32.mrf.mxu0
  %v1061 = vpop.f32.mrf.mxu0
  %v1062 = vadd.f32 0.0, %v1061
  %v1063 = vpop.f32.mrf.mxu0
  %1064 = vmatprep.mubr.bf16.mxu0 0
  %1065 = vmatmul.mubr.bf16.gmra.mxu0 %v607
  %v1066 = vpop.f32.mrf.mxu0
  %v1067 = vadd.f32 0.0, %v1066
  %v1068 = vpop.f32.mrf.mxu0
  %v1069 = vpop.f32.mrf.mxu0
  %v1070 = vadd.f32 0.0, %v1069
  %v1071 = vpop.f32.mrf.mxu0
  %1072 = vmatprep.mubr.bf16.mxu0 0
  %1073 = vmatmul.mubr.bf16.gmra.mxu0 %v610
  %v1074 = vpop.f32.mrf.mxu0
  %v1075 = vadd.f32 0.0, %v1074
  %v1076 = vpop.f32.mrf.mxu0
  %v1077 = vpop.f32.mrf.mxu0
  %v1078 = vadd.f32 0.0, %v1077
  %v1079 = vpop.f32.mrf.mxu0
  %1080 = vmatprep.mubr.bf16.mxu0 0
  %1081 = vmatmul.mubr.bf16.gmra.mxu0 %v613
  %v1082 = vpop.f32.mrf.mxu0
  %v1083 = vadd.f32 0.0, %v1082
  %v1084 = vpop.f32.mrf.mxu0
  %v1085 = vpop.f32.mrf.mxu0
  %v1086 = vadd.f32 0.0, %v1085
  %v1087 = vpop.f32.mrf.mxu0
  %1088 = vmatprep.mubr.bf16.mxu0 0
  %1089 = vmatmul.mubr.bf16.gmra.mxu0 %v616
  %v1090 = vpop.f32.mrf.mxu0
  %v1091 = vadd.f32 0.0, %v1090
  %v1092 = vpop.f32.mrf.mxu0
  %v1093 = vpop.f32.mrf.mxu0
  %v1094 = vadd.f32 0.0, %v1093
  %v1095 = vpop.f32.mrf.mxu0
  %1096 = vmatprep.mubr.bf16.mxu0 0
  %1097 = vmatmul.mubr.bf16.gmra.mxu0 %v619
  %v1098 = vpop.f32.mrf.mxu0
  %v1099 = vadd.f32 0.0, %v1098
  %v1100 = vpop.f32.mrf.mxu0
  %v1101 = vpop.f32.mrf.mxu0
  %v1102 = vadd.f32 0.0, %v1101
  %v1103 = vpop.f32.mrf.mxu0
  %1104 = vmatprep.mubr.bf16.mxu0 0
  %1105 = vmatmul.mubr.bf16.gmra.mxu0 %v622
  %v1106 = vpop.f32.mrf.mxu0
  %v1107 = vadd.f32 0.0, %v1106
  %v1108 = vpop.f32.mrf.mxu0
  %v1109 = vpop.f32.mrf.mxu0
  %v1110 = vadd.f32 0.0, %v1109
  %v1111 = vpop.f32.mrf.mxu0
  %1112 = vmatprep.mubr.bf16.mxu0 0
  %1113 = vmatmul.mubr.bf16.gmra.mxu0 %v625
  %v1114 = vpop.f32.mrf.mxu0
  %v1115 = vadd.f32 0.0, %v1114
  %v1116 = vpop.f32.mrf.mxu0
  %v1117 = vpop.f32.mrf.mxu0
  %v1118 = vadd.f32 0.0, %v1117
  %v1119 = vpop.f32.mrf.mxu0
  %1120 = vmatprep.mubr.bf16.mxu0 0
  %1121 = vmatmul.mubr.bf16.gmra.mxu0 %v628
  %v1122 = vpop.f32.mrf.mxu0
  %v1123 = vadd.f32 0.0, %v1122
  %v1124 = vpop.f32.mrf.mxu0
  %v1125 = vpop.f32.mrf.mxu0
  %v1126 = vadd.f32 0.0, %v1125
  %v1127 = vpop.f32.mrf.mxu0
  %1128 = vmatprep.mubr.bf16.mxu0 0
  %1129 = vmatmul.mubr.bf16.gmra.mxu0 %v631
  %v1130 = vpop.f32.mrf.mxu0
  %v1131 = vadd.f32 0.0, %v1130
  %v1132 = vpop.f32.mrf.mxu0
  %v1133 = vpop.f32.mrf.mxu0
  %v1134 = vadd.f32 0.0, %v1133
  %v1135 = vpop.f32.mrf.mxu0
  %1136 = vmatprep.mubr.bf16.mxu0 0
  %1137 = vmatmul.mubr.bf16.gmra.mxu0 %v634
  %v1138 = vpop.f32.mrf.mxu0
  %v1139 = vadd.f32 0.0, %v1138
  %v1140 = vpop.f32.mrf.mxu0
  %v1141 = vpop.f32.mrf.mxu0
  %v1142 = vadd.f32 0.0, %v1141
  %v1143 = vpop.f32.mrf.mxu0
  %1144 = vmatprep.mubr.bf16.mxu0 0
  %1145 = vmatmul.mubr.bf16.gmra.mxu0 %v637
  %v1146 = vpop.f32.mrf.mxu0
  %v1147 = vadd.f32 0.0, %v1146
  %v1148 = vpop.f32.mrf.mxu0
  %v1149 = vpop.f32.mrf.mxu0
  %v1150 = vadd.f32 0.0, %v1149
  %v1151 = vpop.f32.mrf.mxu0
  %1152 = vmatprep.mubr.bf16.mxu0 0
  %1153 = vmatmul.mubr.bf16.gmra.mxu0 %v640
  %v1154 = vpop.f32.mrf.mxu0
  %v1155 = vadd.f32 0.0, %v1154
  %v1156 = vpop.f32.mrf.mxu0
  %v1157 = vpop.f32.mrf.mxu0
  %v1158 = vadd.f32 0.0, %v1157
  %v1159 = vpop.f32.mrf.mxu0
  %1160 = vmatprep.mubr.bf16.mxu0 0
  %1161 = vmatmul.mubr.bf16.gmra.mxu0 %v643
  %v1162 = vpop.f32.mrf.mxu0
  %v1163 = vadd.f32 0.0, %v1162
  %v1164 = vpop.f32.mrf.mxu0
  %v1165 = vpop.f32.mrf.mxu0
  %v1166 = vadd.f32 0.0, %v1165
  %v1167 = vpop.f32.mrf.mxu0
  %1168 = vmatprep.mubr.bf16.mxu0 0
  %1169 = vmatmul.mubr.bf16.gmra.mxu0 %v646
  %v1170 = vpop.f32.mrf.mxu0
  %v1171 = vadd.f32 0.0, %v1170
  %v1172 = vpop.f32.mrf.mxu0
  %v1173 = vpop.f32.mrf.mxu0
  %v1174 = vadd.f32 0.0, %v1173
  %v1175 = vpop.f32.mrf.mxu0
  %1176 = vmatprep.mubr.bf16.mxu0 0
  %1177 = vmatmul.mubr.bf16.gmra.mxu0 %v649
  %v1178 = vpop.f32.mrf.mxu0
  %v1179 = vadd.f32 0.0, %v1178
  %v1180 = vpop.f32.mrf.mxu0
  %v1181 = vpop.f32.mrf.mxu0
  %v1182 = vadd.f32 0.0, %v1181
  %v1183 = vpop.f32.mrf.mxu0
  %1184 = vmatprep.mubr.bf16.mxu0 0
  %1185 = vmatmul.mubr.bf16.gmra.mxu0 %v652
  %v1186 = vpop.f32.mrf.mxu0
  %v1187 = vadd.f32 0.0, %v1186
  %v1188 = vpop.f32.mrf.mxu0
  %v1189 = vpop.f32.mrf.mxu0
  %v1190 = vadd.f32 0.0, %v1189
  %v1191 = vpop.f32.mrf.mxu0
  %1192 = vmatprep.mubr.bf16.mxu0 0
  %1193 = vmatmul.mubr.bf16.gmra.mxu0 %v655
  %v1194 = vpop.f32.mrf.mxu0
  %v1195 = vadd.f32 0.0, %v1194
  %v1196 = vpop.f32.mrf.mxu0
  %v1197 = vpop.f32.mrf.mxu0
  %v1198 = vadd.f32 0.0, %v1197
  %v1199 = vpop.f32.mrf.mxu0
  %1200 = vmatprep.mubr.bf16.mxu0 0
  %1201 = vmatmul.mubr.bf16.gmra.mxu0 %v658
  %v1202 = vpop.f32.mrf.mxu0
  %v1203 = vadd.f32 0.0, %v1202
  %v1204 = vpop.f32.mrf.mxu0
  %v1205 = vpop.f32.mrf.mxu0
  %v1206 = vadd.f32 0.0, %v1205
  %v1207 = vpop.f32.mrf.mxu0
  %1208 = vdwg.mxu0
  %v1209 = vld [vmem:[%s2] sm:$0x1]
  %v1211 = vlaneseq
  %v1212 = vshrl.u32 %v1211, 7
  %v1213 = vsub.s32 0, %v1212
  %v1214 = vrot.slane %v1209, %v1213
  %v1216 = vmul.f32 %v699, %v1214
  %v1217 = vmul.f32 %v702, %v1214
  %v1218 = vmul.f32 %v707, %v1214
  %v1219 = vmul.f32 %v710, %v1214
  %v1220 = vmul.f32 %v715, %v1214
  %v1221 = vmul.f32 %v718, %v1214
  %v1222 = vmul.f32 %v723, %v1214
  %v1223 = vmul.f32 %v726, %v1214
  %v1224 = vmul.f32 %v731, %v1214
  %v1225 = vmul.f32 %v734, %v1214
  %v1226 = vmul.f32 %v739, %v1214
  %v1227 = vmul.f32 %v742, %v1214
  %v1228 = vmul.f32 %v747, %v1214
  %v1229 = vmul.f32 %v750, %v1214
  %v1230 = vmul.f32 %v755, %v1214
  %v1231 = vmul.f32 %v758, %v1214
  %v1232 = vmul.f32 %v763, %v1214
  %v1233 = vmul.f32 %v766, %v1214
  %v1234 = vmul.f32 %v771, %v1214
  %v1235 = vmul.f32 %v774, %v1214
  %v1236 = vmul.f32 %v779, %v1214
  %v1237 = vmul.f32 %v782, %v1214
  %v1238 = vmul.f32 %v787, %v1214
  %v1239 = vmul.f32 %v790, %v1214
  %v1240 = vmul.f32 %v795, %v1214
  %v1241 = vmul.f32 %v798, %v1214
  %v1242 = vmul.f32 %v803, %v1214
  %v1243 = vmul.f32 %v806, %v1214
  %v1244 = vmul.f32 %v811, %v1214
  %v1245 = vmul.f32 %v814, %v1214
  %v1246 = vmul.f32 %v819, %v1214
  %v1247 = vmul.f32 %v822, %v1214
  %v1248 = vmul.f32 %v827, %v1214
  %v1249 = vmul.f32 %v830, %v1214
  %v1250 = vmul.f32 %v835, %v1214
  %v1251 = vmul.f32 %v838, %v1214
  %v1252 = vmul.f32 %v843, %v1214
  %v1253 = vmul.f32 %v846, %v1214
  %v1254 = vmul.f32 %v851, %v1214
  %v1255 = vmul.f32 %v854, %v1214
  %v1256 = vmul.f32 %v859, %v1214
  %v1257 = vmul.f32 %v862, %v1214
  %v1258 = vmul.f32 %v867, %v1214
  %v1259 = vmul.f32 %v870, %v1214
  %v1260 = vmul.f32 %v875, %v1214
  %v1261 = vmul.f32 %v878, %v1214
  %v1262 = vmul.f32 %v883, %v1214
  %v1263 = vmul.f32 %v886, %v1214
  %v1264 = vmul.f32 %v891, %v1214
  %v1265 = vmul.f32 %v894, %v1214
  %v1266 = vmul.f32 %v899, %v1214
  %v1267 = vmul.f32 %v902, %v1214
  %v1268 = vmul.f32 %v907, %v1214
  %v1269 = vmul.f32 %v910, %v1214
  %v1270 = vmul.f32 %v915, %v1214
  %v1271 = vmul.f32 %v918, %v1214
  %v1272 = vmul.f32 %v923, %v1214
  %v1273 = vmul.f32 %v926, %v1214
  %v1274 = vmul.f32 %v931, %v1214
  %v1275 = vmul.f32 %v934, %v1214
  %v1276 = vmul.f32 %v939, %v1214
  %v1277 = vmul.f32 %v942, %v1214
  %v1278 = vmul.f32 %v947, %v1214
  %v1279 = vmul.f32 %v950, %v1214
  %v1280 = vmul.f32 %v955, %v1214
  %v1281 = vmul.f32 %v958, %v1214
  %v1282 = vmul.f32 %v963, %v1214
  %v1283 = vmul.f32 %v966, %v1214
  %v1284 = vmul.f32 %v971, %v1214
  %v1285 = vmul.f32 %v974, %v1214
  %v1286 = vmul.f32 %v979, %v1214
  %v1287 = vmul.f32 %v982, %v1214
  %v1288 = vmul.f32 %v987, %v1214
  %v1289 = vmul.f32 %v990, %v1214
  %v1290 = vmul.f32 %v995, %v1214
  %v1291 = vmul.f32 %v998, %v1214
  %v1292 = vmul.f32 %v1003, %v1214
  %v1293 = vmul.f32 %v1006, %v1214
  %v1294 = vmul.f32 %v1011, %v1214
  %v1295 = vmul.f32 %v1014, %v1214
  %v1296 = vmul.f32 %v1019, %v1214
  %v1297 = vmul.f32 %v1022, %v1214
  %v1298 = vmul.f32 %v1027, %v1214
  %v1299 = vmul.f32 %v1030, %v1214
  %v1300 = vmul.f32 %v1035, %v1214
  %v1301 = vmul.f32 %v1038, %v1214
  %v1302 = vmul.f32 %v1043, %v1214
  %v1303 = vmul.f32 %v1046, %v1214
  %v1304 = vmul.f32 %v1051, %v1214
  %v1305 = vmul.f32 %v1054, %v1214
  %v1306 = vmul.f32 %v1059, %v1214
  %v1307 = vmul.f32 %v1062, %v1214
  %v1308 = vmul.f32 %v1067, %v1214
  %v1309 = vmul.f32 %v1070, %v1214
  %v1310 = vmul.f32 %v1075, %v1214
  %v1311 = vmul.f32 %v1078, %v1214
  %v1312 = vmul.f32 %v1083, %v1214
  %v1313 = vmul.f32 %v1086, %v1214
  %v1314 = vmul.f32 %v1091, %v1214
  %v1315 = vmul.f32 %v1094, %v1214
  %v1316 = vmul.f32 %v1099, %v1214
  %v1317 = vmul.f32 %v1102, %v1214
  %v1318 = vmul.f32 %v1107, %v1214
  %v1319 = vmul.f32 %v1110, %v1214
  %v1320 = vmul.f32 %v1115, %v1214
  %v1321 = vmul.f32 %v1118, %v1214
  %v1322 = vmul.f32 %v1123, %v1214
  %v1323 = vmul.f32 %v1126, %v1214
  %v1324 = vmul.f32 %v1131, %v1214
  %v1325 = vmul.f32 %v1134, %v1214
  %v1326 = vmul.f32 %v1139, %v1214
  %v1327 = vmul.f32 %v1142, %v1214
  %v1328 = vmul.f32 %v1147, %v1214
  %v1329 = vmul.f32 %v1150, %v1214
  %v1330 = vmul.f32 %v1155, %v1214
  %v1331 = vmul.f32 %v1158, %v1214
  %v1332 = vmul.f32 %v1163, %v1214
  %v1333 = vmul.f32 %v1166, %v1214
  %v1334 = vmul.f32 %v1171, %v1214
  %v1335 = vmul.f32 %v1174, %v1214
  %v1336 = vmul.f32 %v1179, %v1214
  %v1337 = vmul.f32 %v1182, %v1214
  %v1338 = vmul.f32 %v1187, %v1214
  %v1339 = vmul.f32 %v1190, %v1214
  %v1340 = vmul.f32 %v1195, %v1214
  %v1341 = vmul.f32 %v1198, %v1214
  %v1342 = vmul.f32 %v1203, %v1214
  %v1343 = vmul.f32 %v1206, %v1214
  %v1344 = vld [vmem:[%s3] sm:$0x1]
  %v1346 = vlaneseq
  %v1347 = vshrl.u32 %v1346, 7
  %v1348 = vsub.s32 0, %v1347
  %v1349 = vrot.slane %v1344, %v1348
  %v1351 = vadd.f32 %v1216, %v1349
  %v1352 = vadd.f32 %v1217, %v1349
  %v1353 = vadd.f32 %v1218, %v1349
  %v1354 = vadd.f32 %v1219, %v1349
  %v1355 = vadd.f32 %v1220, %v1349
  %v1356 = vadd.f32 %v1221, %v1349
  %v1357 = vadd.f32 %v1222, %v1349
  %v1358 = vadd.f32 %v1223, %v1349
  %v1359 = vadd.f32 %v1224, %v1349
  %v1360 = vadd.f32 %v1225, %v1349
  %v1361 = vadd.f32 %v1226, %v1349
  %v1362 = vadd.f32 %v1227, %v1349
  %v1363 = vadd.f32 %v1228, %v1349
  %v1364 = vadd.f32 %v1229, %v1349
  %v1365 = vadd.f32 %v1230, %v1349
  %v1366 = vadd.f32 %v1231, %v1349
  %v1367 = vadd.f32 %v1232, %v1349
  %v1368 = vadd.f32 %v1233, %v1349
  %v1369 = vadd.f32 %v1234, %v1349
  %v1370 = vadd.f32 %v1235, %v1349
  %v1371 = vadd.f32 %v1236, %v1349
  %v1372 = vadd.f32 %v1237, %v1349
  %v1373 = vadd.f32 %v1238, %v1349
  %v1374 = vadd.f32 %v1239, %v1349
  %v1375 = vadd.f32 %v1240, %v1349
  %v1376 = vadd.f32 %v1241, %v1349
  %v1377 = vadd.f32 %v1242, %v1349
  %v1378 = vadd.f32 %v1243, %v1349
  %v1379 = vadd.f32 %v1244, %v1349
  %v1380 = vadd.f32 %v1245, %v1349
  %v1381 = vadd.f32 %v1246, %v1349
  %v1382 = vadd.f32 %v1247, %v1349
  %v1383 = vadd.f32 %v1248, %v1349
  %v1384 = vadd.f32 %v1249, %v1349
  %v1385 = vadd.f32 %v1250, %v1349
  %v1386 = vadd.f32 %v1251, %v1349
  %v1387 = vadd.f32 %v1252, %v1349
  %v1388 = vadd.f32 %v1253, %v1349
  %v1389 = vadd.f32 %v1254, %v1349
  %v1390 = vadd.f32 %v1255, %v1349
  %v1391 = vadd.f32 %v1256, %v1349
  %v1392 = vadd.f32 %v1257, %v1349
  %v1393 = vadd.f32 %v1258, %v1349
  %v1394 = vadd.f32 %v1259, %v1349
  %v1395 = vadd.f32 %v1260, %v1349
  %v1396 = vadd.f32 %v1261, %v1349
  %v1397 = vadd.f32 %v1262, %v1349
  %v1398 = vadd.f32 %v1263, %v1349
  %v1399 = vadd.f32 %v1264, %v1349
  %v1400 = vadd.f32 %v1265, %v1349
  %v1401 = vadd.f32 %v1266, %v1349
  %v1402 = vadd.f32 %v1267, %v1349
  %v1403 = vadd.f32 %v1268, %v1349
  %v1404 = vadd.f32 %v1269, %v1349
  %v1405 = vadd.f32 %v1270, %v1349
  %v1406 = vadd.f32 %v1271, %v1349
  %v1407 = vadd.f32 %v1272, %v1349
  %v1408 = vadd.f32 %v1273, %v1349
  %v1409 = vadd.f32 %v1274, %v1349
  %v1410 = vadd.f32 %v1275, %v1349
  %v1411 = vadd.f32 %v1276, %v1349
  %v1412 = vadd.f32 %v1277, %v1349
  %v1413 = vadd.f32 %v1278, %v1349
  %v1414 = vadd.f32 %v1279, %v1349
  %v1415 = vadd.f32 %v1280, %v1349
  %v1416 = vadd.f32 %v1281, %v1349
  %v1417 = vadd.f32 %v1282, %v1349
  %v1418 = vadd.f32 %v1283, %v1349
  %v1419 = vadd.f32 %v1284, %v1349
  %v1420 = vadd.f32 %v1285, %v1349
  %v1421 = vadd.f32 %v1286, %v1349
  %v1422 = vadd.f32 %v1287, %v1349
  %v1423 = vadd.f32 %v1288, %v1349
  %v1424 = vadd.f32 %v1289, %v1349
  %v1425 = vadd.f32 %v1290, %v1349
  %v1426 = vadd.f32 %v1291, %v1349
  %v1427 = vadd.f32 %v1292, %v1349
  %v1428 = vadd.f32 %v1293, %v1349
  %v1429 = vadd.f32 %v1294, %v1349
  %v1430 = vadd.f32 %v1295, %v1349
  %v1431 = vadd.f32 %v1296, %v1349
  %v1432 = vadd.f32 %v1297, %v1349
  %v1433 = vadd.f32 %v1298, %v1349
  %v1434 = vadd.f32 %v1299, %v1349
  %v1435 = vadd.f32 %v1300, %v1349
  %v1436 = vadd.f32 %v1301, %v1349
  %v1437 = vadd.f32 %v1302, %v1349
  %v1438 = vadd.f32 %v1303, %v1349
  %v1439 = vadd.f32 %v1304, %v1349
  %v1440 = vadd.f32 %v1305, %v1349
  %v1441 = vadd.f32 %v1306, %v1349
  %v1442 = vadd.f32 %v1307, %v1349
  %v1443 = vadd.f32 %v1308, %v1349
  %v1444 = vadd.f32 %v1309, %v1349
  %v1445 = vadd.f32 %v1310, %v1349
  %v1446 = vadd.f32 %v1311, %v1349
  %v1447 = vadd.f32 %v1312, %v1349
  %v1448 = vadd.f32 %v1313, %v1349
  %v1449 = vadd.f32 %v1314, %v1349
  %v1450 = vadd.f32 %v1315, %v1349
  %v1451 = vadd.f32 %v1316, %v1349
  %v1452 = vadd.f32 %v1317, %v1349
  %v1453 = vadd.f32 %v1318, %v1349
  %v1454 = vadd.f32 %v1319, %v1349
  %v1455 = vadd.f32 %v1320, %v1349
  %v1456 = vadd.f32 %v1321, %v1349
  %v1457 = vadd.f32 %v1322, %v1349
  %v1458 = vadd.f32 %v1323, %v1349
  %v1459 = vadd.f32 %v1324, %v1349
  %v1460 = vadd.f32 %v1325, %v1349
  %v1461 = vadd.f32 %v1326, %v1349
  %v1462 = vadd.f32 %v1327, %v1349
  %v1463 = vadd.f32 %v1328, %v1349
  %v1464 = vadd.f32 %v1329, %v1349
  %v1465 = vadd.f32 %v1330, %v1349
  %v1466 = vadd.f32 %v1331, %v1349
  %v1467 = vadd.f32 %v1332, %v1349
  %v1468 = vadd.f32 %v1333, %v1349
  %v1469 = vadd.f32 %v1334, %v1349
  %v1470 = vadd.f32 %v1335, %v1349
  %v1471 = vadd.f32 %v1336, %v1349
  %v1472 = vadd.f32 %v1337, %v1349
  %v1473 = vadd.f32 %v1338, %v1349
  %v1474 = vadd.f32 %v1339, %v1349
  %v1475 = vadd.f32 %v1340, %v1349
  %v1476 = vadd.f32 %v1341, %v1349
  %v1477 = vadd.f32 %v1342, %v1349
  %v1478 = vadd.f32 %v1343, %v1349
  %v1479 = vmax.f32 %v1351, 0.0
  %v1480 = vmax.f32 %v1352, 0.0
  %v1481 = vmax.f32 %v1353, 0.0
  %v1482 = vmax.f32 %v1354, 0.0
  %v1483 = vmax.f32 %v1355, 0.0
  %v1484 = vmax.f32 %v1356, 0.0
  %v1485 = vmax.f32 %v1357, 0.0
  %v1486 = vmax.f32 %v1358, 0.0
  %v1487 = vmax.f32 %v1359, 0.0
  %v1488 = vmax.f32 %v1360, 0.0
  %v1489 = vmax.f32 %v1361, 0.0
  %v1490 = vmax.f32 %v1362, 0.0
  %v1491 = vmax.f32 %v1363, 0.0
  %v1492 = vmax.f32 %v1364, 0.0
  %v1493 = vmax.f32 %v1365, 0.0
  %v1494 = vmax.f32 %v1366, 0.0
  %v1495 = vmax.f32 %v1367, 0.0
  %v1496 = vmax.f32 %v1368, 0.0
  %v1497 = vmax.f32 %v1369, 0.0
  %v1498 = vmax.f32 %v1370, 0.0
  %v1499 = vmax.f32 %v1371, 0.0
  %v1500 = vmax.f32 %v1372, 0.0
  %v1501 = vmax.f32 %v1373, 0.0
  %v1502 = vmax.f32 %v1374, 0.0
  %v1503 = vmax.f32 %v1375, 0.0
  %v1504 = vmax.f32 %v1376, 0.0
  %v1505 = vmax.f32 %v1377, 0.0
  %v1506 = vmax.f32 %v1378, 0.0
  %v1507 = vmax.f32 %v1379, 0.0
  %v1508 = vmax.f32 %v1380, 0.0
  %v1509 = vmax.f32 %v1381, 0.0
  %v1510 = vmax.f32 %v1382, 0.0
  %v1511 = vmax.f32 %v1383, 0.0
  %v1512 = vmax.f32 %v1384, 0.0
  %v1513 = vmax.f32 %v1385, 0.0
  %v1514 = vmax.f32 %v1386, 0.0
  %v1515 = vmax.f32 %v1387, 0.0
  %v1516 = vmax.f32 %v1388, 0.0
  %v1517 = vmax.f32 %v1389, 0.0
  %v1518 = vmax.f32 %v1390, 0.0
  %v1519 = vmax.f32 %v1391, 0.0
  %v1520 = vmax.f32 %v1392, 0.0
  %v1521 = vmax.f32 %v1393, 0.0
  %v1522 = vmax.f32 %v1394, 0.0
  %v1523 = vmax.f32 %v1395, 0.0
  %v1524 = vmax.f32 %v1396, 0.0
  %v1525 = vmax.f32 %v1397, 0.0
  %v1526 = vmax.f32 %v1398, 0.0
  %v1527 = vmax.f32 %v1399, 0.0
  %v1528 = vmax.f32 %v1400, 0.0
  %v1529 = vmax.f32 %v1401, 0.0
  %v1530 = vmax.f32 %v1402, 0.0
  %v1531 = vmax.f32 %v1403, 0.0
  %v1532 = vmax.f32 %v1404, 0.0
  %v1533 = vmax.f32 %v1405, 0.0
  %v1534 = vmax.f32 %v1406, 0.0
  %v1535 = vmax.f32 %v1407, 0.0
  %v1536 = vmax.f32 %v1408, 0.0
  %v1537 = vmax.f32 %v1409, 0.0
  %v1538 = vmax.f32 %v1410, 0.0
  %v1539 = vmax.f32 %v1411, 0.0
  %v1540 = vmax.f32 %v1412, 0.0
  %v1541 = vmax.f32 %v1413, 0.0
  %v1542 = vmax.f32 %v1414, 0.0
  %v1543 = vmax.f32 %v1415, 0.0
  %v1544 = vmax.f32 %v1416, 0.0
  %v1545 = vmax.f32 %v1417, 0.0
  %v1546 = vmax.f32 %v1418, 0.0
  %v1547 = vmax.f32 %v1419, 0.0
  %v1548 = vmax.f32 %v1420, 0.0
  %v1549 = vmax.f32 %v1421, 0.0
  %v1550 = vmax.f32 %v1422, 0.0
  %v1551 = vmax.f32 %v1423, 0.0
  %v1552 = vmax.f32 %v1424, 0.0
  %v1553 = vmax.f32 %v1425, 0.0
  %v1554 = vmax.f32 %v1426, 0.0
  %v1555 = vmax.f32 %v1427, 0.0
  %v1556 = vmax.f32 %v1428, 0.0
  %v1557 = vmax.f32 %v1429, 0.0
  %v1558 = vmax.f32 %v1430, 0.0
  %v1559 = vmax.f32 %v1431, 0.0
  %v1560 = vmax.f32 %v1432, 0.0
  %v1561 = vmax.f32 %v1433, 0.0
  %v1562 = vmax.f32 %v1434, 0.0
  %v1563 = vmax.f32 %v1435, 0.0
  %v1564 = vmax.f32 %v1436, 0.0
  %v1565 = vmax.f32 %v1437, 0.0
  %v1566 = vmax.f32 %v1438, 0.0
  %v1567 = vmax.f32 %v1439, 0.0
  %v1568 = vmax.f32 %v1440, 0.0
  %v1569 = vmax.f32 %v1441, 0.0
  %v1570 = vmax.f32 %v1442, 0.0
  %v1571 = vmax.f32 %v1443, 0.0
  %v1572 = vmax.f32 %v1444, 0.0
  %v1573 = vmax.f32 %v1445, 0.0
  %v1574 = vmax.f32 %v1446, 0.0
  %v1575 = vmax.f32 %v1447, 0.0
  %v1576 = vmax.f32 %v1448, 0.0
  %v1577 = vmax.f32 %v1449, 0.0
  %v1578 = vmax.f32 %v1450, 0.0
  %v1579 = vmax.f32 %v1451, 0.0
  %v1580 = vmax.f32 %v1452, 0.0
  %v1581 = vmax.f32 %v1453, 0.0
  %v1582 = vmax.f32 %v1454, 0.0
  %v1583 = vmax.f32 %v1455, 0.0
  %v1584 = vmax.f32 %v1456, 0.0
  %v1585 = vmax.f32 %v1457, 0.0
  %v1586 = vmax.f32 %v1458, 0.0
  %v1587 = vmax.f32 %v1459, 0.0
  %v1588 = vmax.f32 %v1460, 0.0
  %v1589 = vmax.f32 %v1461, 0.0
  %v1590 = vmax.f32 %v1462, 0.0
  %v1591 = vmax.f32 %v1463, 0.0
  %v1592 = vmax.f32 %v1464, 0.0
  %v1593 = vmax.f32 %v1465, 0.0
  %v1594 = vmax.f32 %v1466, 0.0
  %v1595 = vmax.f32 %v1467, 0.0
  %v1596 = vmax.f32 %v1468, 0.0
  %v1597 = vmax.f32 %v1469, 0.0
  %v1598 = vmax.f32 %v1470, 0.0
  %v1599 = vmax.f32 %v1471, 0.0
  %v1600 = vmax.f32 %v1472, 0.0
  %v1601 = vmax.f32 %v1473, 0.0
  %v1602 = vmax.f32 %v1474, 0.0
  %v1603 = vmax.f32 %v1475, 0.0
  %v1604 = vmax.f32 %v1476, 0.0
  %v1605 = vmax.f32 %v1477, 0.0
  %v1606 = vmax.f32 %v1478, 0.0
  %v1607 = vpack.c.bf16 %v1480, %v1479
  %v1608 = vpack.c.bf16 %v1482, %v1481
  %v1609 = vpack.c.bf16 %v1484, %v1483
  %v1610 = vpack.c.bf16 %v1486, %v1485
  %v1611 = vpack.c.bf16 %v1488, %v1487
  %v1612 = vpack.c.bf16 %v1490, %v1489
  %v1613 = vpack.c.bf16 %v1492, %v1491
  %v1614 = vpack.c.bf16 %v1494, %v1493
  %v1615 = vpack.c.bf16 %v1496, %v1495
  %v1616 = vpack.c.bf16 %v1498, %v1497
  %v1617 = vpack.c.bf16 %v1500, %v1499
  %v1618 = vpack.c.bf16 %v1502, %v1501
  %v1619 = vpack.c.bf16 %v1504, %v1503
  %v1620 = vpack.c.bf16 %v1506, %v1505
  %v1621 = vpack.c.bf16 %v1508, %v1507
  %v1622 = vpack.c.bf16 %v1510, %v1509
  %v1623 = vpack.c.bf16 %v1512, %v1511
  %v1624 = vpack.c.bf16 %v1514, %v1513
  %v1625 = vpack.c.bf16 %v1516, %v1515
  %v1626 = vpack.c.bf16 %v1518, %v1517
  %v1627 = vpack.c.bf16 %v1520, %v1519
  %v1628 = vpack.c.bf16 %v1522, %v1521
  %v1629 = vpack.c.bf16 %v1524, %v1523
  %v1630 = vpack.c.bf16 %v1526, %v1525
  %v1631 = vpack.c.bf16 %v1528, %v1527
  %v1632 = vpack.c.bf16 %v1530, %v1529
  %v1633 = vpack.c.bf16 %v1532, %v1531
  %v1634 = vpack.c.bf16 %v1534, %v1533
  %v1635 = vpack.c.bf16 %v1536, %v1535
  %v1636 = vpack.c.bf16 %v1538, %v1537
  %v1637 = vpack.c.bf16 %v1540, %v1539
  %v1638 = vpack.c.bf16 %v1542, %v1541
  %v1639 = vpack.c.bf16 %v1544, %v1543
  %v1640 = vpack.c.bf16 %v1546, %v1545
  %v1641 = vpack.c.bf16 %v1548, %v1547
  %v1642 = vpack.c.bf16 %v1550, %v1549
  %v1643 = vpack.c.bf16 %v1552, %v1551
  %v1644 = vpack.c.bf16 %v1554, %v1553
  %v1645 = vpack.c.bf16 %v1556, %v1555
  %v1646 = vpack.c.bf16 %v1558, %v1557
  %v1647 = vpack.c.bf16 %v1560, %v1559
  %v1648 = vpack.c.bf16 %v1562, %v1561
  %v1649 = vpack.c.bf16 %v1564, %v1563
  %v1650 = vpack.c.bf16 %v1566, %v1565
  %v1651 = vpack.c.bf16 %v1568, %v1567
  %v1652 = vpack.c.bf16 %v1570, %v1569
  %v1653 = vpack.c.bf16 %v1572, %v1571
  %v1654 = vpack.c.bf16 %v1574, %v1573
  %v1655 = vpack.c.bf16 %v1576, %v1575
  %v1656 = vpack.c.bf16 %v1578, %v1577
  %v1657 = vpack.c.bf16 %v1580, %v1579
  %v1658 = vpack.c.bf16 %v1582, %v1581
  %v1659 = vpack.c.bf16 %v1584, %v1583
  %v1660 = vpack.c.bf16 %v1586, %v1585
  %v1661 = vpack.c.bf16 %v1588, %v1587
  %v1662 = vpack.c.bf16 %v1590, %v1589
  %v1663 = vpack.c.bf16 %v1592, %v1591
  %v1664 = vpack.c.bf16 %v1594, %v1593
  %v1665 = vpack.c.bf16 %v1596, %v1595
  %v1666 = vpack.c.bf16 %v1598, %v1597
  %v1667 = vpack.c.bf16 %v1600, %v1599
  %v1668 = vpack.c.bf16 %v1602, %v1601
  %v1669 = vpack.c.bf16 %v1604, %v1603
  %v1670 = vpack.c.bf16 %v1606, %v1605
  %v1735 = vunpack.c.l.b16 %v1607
  %v1736 = vunpack.c.h.b16 %v1607
  %v1737 = vunpack.c.l.b16 %v1608
  %v1738 = vunpack.c.h.b16 %v1608
  %v1739 = vunpack.c.l.b16 %v1609
  %v1740 = vunpack.c.h.b16 %v1609
  %v1741 = vunpack.c.l.b16 %v1610
  %v1742 = vunpack.c.h.b16 %v1610
  %v1743 = vunpack.c.l.b16 %v1611
  %v1744 = vunpack.c.h.b16 %v1611
  %v1745 = vunpack.c.l.b16 %v1612
  %v1746 = vunpack.c.h.b16 %v1612
  %v1747 = vunpack.c.l.b16 %v1613
  %v1748 = vunpack.c.h.b16 %v1613
  %v1749 = vunpack.c.l.b16 %v1614
  %v1750 = vunpack.c.h.b16 %v1614
  %v1751 = vunpack.c.l.b16 %v1615
  %v1752 = vunpack.c.h.b16 %v1615
  %v1753 = vunpack.c.l.b16 %v1616
  %v1754 = vunpack.c.h.b16 %v1616
  %v1755 = vunpack.c.l.b16 %v1617
  %v1756 = vunpack.c.h.b16 %v1617
  %v1757 = vunpack.c.l.b16 %v1618
  %v1758 = vunpack.c.h.b16 %v1618
  %v1759 = vunpack.c.l.b16 %v1619
  %v1760 = vunpack.c.h.b16 %v1619
  %v1761 = vunpack.c.l.b16 %v1620
  %v1762 = vunpack.c.h.b16 %v1620
  %v1763 = vunpack.c.l.b16 %v1621
  %v1764 = vunpack.c.h.b16 %v1621
  %v1765 = vunpack.c.l.b16 %v1622
  %v1766 = vunpack.c.h.b16 %v1622
  %v1767 = vunpack.c.l.b16 %v1623
  %v1768 = vunpack.c.h.b16 %v1623
  %v1769 = vunpack.c.l.b16 %v1624
  %v1770 = vunpack.c.h.b16 %v1624
  %v1771 = vunpack.c.l.b16 %v1625
  %v1772 = vunpack.c.h.b16 %v1625
  %v1773 = vunpack.c.l.b16 %v1626
  %v1774 = vunpack.c.h.b16 %v1626
  %v1775 = vunpack.c.l.b16 %v1627
  %v1776 = vunpack.c.h.b16 %v1627
  %v1777 = vunpack.c.l.b16 %v1628
  %v1778 = vunpack.c.h.b16 %v1628
  %v1779 = vunpack.c.l.b16 %v1629
  %v1780 = vunpack.c.h.b16 %v1629
  %v1781 = vunpack.c.l.b16 %v1630
  %v1782 = vunpack.c.h.b16 %v1630
  %v1783 = vunpack.c.l.b16 %v1631
  %v1784 = vunpack.c.h.b16 %v1631
  %v1785 = vunpack.c.l.b16 %v1632
  %v1786 = vunpack.c.h.b16 %v1632
  %v1787 = vunpack.c.l.b16 %v1633
  %v1788 = vunpack.c.h.b16 %v1633
  %v1789 = vunpack.c.l.b16 %v1634
  %v1790 = vunpack.c.h.b16 %v1634
  %v1791 = vunpack.c.l.b16 %v1635
  %v1792 = vunpack.c.h.b16 %v1635
  %v1793 = vunpack.c.l.b16 %v1636
  %v1794 = vunpack.c.h.b16 %v1636
  %v1795 = vunpack.c.l.b16 %v1637
  %v1796 = vunpack.c.h.b16 %v1637
  %v1797 = vunpack.c.l.b16 %v1638
  %v1798 = vunpack.c.h.b16 %v1638
  %v1799 = vunpack.c.l.b16 %v1639
  %v1800 = vunpack.c.h.b16 %v1639
  %v1801 = vunpack.c.l.b16 %v1640
  %v1802 = vunpack.c.h.b16 %v1640
  %v1803 = vunpack.c.l.b16 %v1641
  %v1804 = vunpack.c.h.b16 %v1641
  %v1805 = vunpack.c.l.b16 %v1642
  %v1806 = vunpack.c.h.b16 %v1642
  %v1807 = vunpack.c.l.b16 %v1643
  %v1808 = vunpack.c.h.b16 %v1643
  %v1809 = vunpack.c.l.b16 %v1644
  %v1810 = vunpack.c.h.b16 %v1644
  %v1811 = vunpack.c.l.b16 %v1645
  %v1812 = vunpack.c.h.b16 %v1645
  %v1813 = vunpack.c.l.b16 %v1646
  %v1814 = vunpack.c.h.b16 %v1646
  %v1815 = vunpack.c.l.b16 %v1647
  %v1816 = vunpack.c.h.b16 %v1647
  %v1817 = vunpack.c.l.b16 %v1648
  %v1818 = vunpack.c.h.b16 %v1648
  %v1819 = vunpack.c.l.b16 %v1649
  %v1820 = vunpack.c.h.b16 %v1649
  %v1821 = vunpack.c.l.b16 %v1650
  %v1822 = vunpack.c.h.b16 %v1650
  %v1823 = vunpack.c.l.b16 %v1651
  %v1824 = vunpack.c.h.b16 %v1651
  %v1825 = vunpack.c.l.b16 %v1652
  %v1826 = vunpack.c.h.b16 %v1652
  %v1827 = vunpack.c.l.b16 %v1653
  %v1828 = vunpack.c.h.b16 %v1653
  %v1829 = vunpack.c.l.b16 %v1654
  %v1830 = vunpack.c.h.b16 %v1654
  %v1831 = vunpack.c.l.b16 %v1655
  %v1832 = vunpack.c.h.b16 %v1655
  %v1833 = vunpack.c.l.b16 %v1656
  %v1834 = vunpack.c.h.b16 %v1656
  %v1835 = vunpack.c.l.b16 %v1657
  %v1836 = vunpack.c.h.b16 %v1657
  %v1837 = vunpack.c.l.b16 %v1658
  %v1838 = vunpack.c.h.b16 %v1658
  %v1839 = vunpack.c.l.b16 %v1659
  %v1840 = vunpack.c.h.b16 %v1659
  %v1841 = vunpack.c.l.b16 %v1660
  %v1842 = vunpack.c.h.b16 %v1660
  %v1843 = vunpack.c.l.b16 %v1661
  %v1844 = vunpack.c.h.b16 %v1661
  %v1845 = vunpack.c.l.b16 %v1662
  %v1846 = vunpack.c.h.b16 %v1662
  %v1847 = vunpack.c.l.b16 %v1663
  %v1848 = vunpack.c.h.b16 %v1663
  %v1849 = vunpack.c.l.b16 %v1664
  %v1850 = vunpack.c.h.b16 %v1664
  %v1851 = vunpack.c.l.b16 %v1665
  %v1852 = vunpack.c.h.b16 %v1665
  %v1853 = vunpack.c.l.b16 %v1666
  %v1854 = vunpack.c.h.b16 %v1666
  %v1855 = vunpack.c.l.b16 %v1667
  %v1856 = vunpack.c.h.b16 %v1667
  %v1857 = vunpack.c.l.b16 %v1668
  %v1858 = vunpack.c.h.b16 %v1668
  %v1859 = vunpack.c.l.b16 %v1669
  %v1860 = vunpack.c.h.b16 %v1669
  %v1861 = vunpack.c.l.b16 %v1670
  %v1862 = vunpack.c.h.b16 %v1670
  %v1863 = vpack.c.b16 %v1735, %v1735
  %v1864 = vpack.c.b16 %v1736, %v1736
  %v1865 = vpack.c.b16 %v1737, %v1737
  %v1866 = vpack.c.b16 %v1738, %v1738
  %v1867 = vpack.c.b16 %v1739, %v1739
  %v1868 = vpack.c.b16 %v1740, %v1740
  %v1869 = vpack.c.b16 %v1741, %v1741
  %v1870 = vpack.c.b16 %v1742, %v1742
  %v1871 = vpack.c.b16 %v1743, %v1743
  %v1872 = vpack.c.b16 %v1744, %v1744
  %v1873 = vpack.c.b16 %v1745, %v1745
  %v1874 = vpack.c.b16 %v1746, %v1746
  %v1875 = vpack.c.b16 %v1747, %v1747
  %v1876 = vpack.c.b16 %v1748, %v1748
  %v1877 = vpack.c.b16 %v1749, %v1749
  %v1878 = vpack.c.b16 %v1750, %v1750
  %v1879 = vpack.c.b16 %v1751, %v1751
  %v1880 = vpack.c.b16 %v1752, %v1752
  %v1881 = vpack.c.b16 %v1753, %v1753
  %v1882 = vpack.c.b16 %v1754, %v1754
  %v1883 = vpack.c.b16 %v1755, %v1755
  %v1884 = vpack.c.b16 %v1756, %v1756
  %v1885 = vpack.c.b16 %v1757, %v1757
  %v1886 = vpack.c.b16 %v1758, %v1758
  %v1887 = vpack.c.b16 %v1759, %v1759
  %v1888 = vpack.c.b16 %v1760, %v1760
  %v1889 = vpack.c.b16 %v1761, %v1761
  %v1890 = vpack.c.b16 %v1762, %v1762
  %v1891 = vpack.c.b16 %v1763, %v1763
  %v1892 = vpack.c.b16 %v1764, %v1764
  %v1893 = vpack.c.b16 %v1765, %v1765
  %v1894 = vpack.c.b16 %v1766, %v1766
  %v1895 = vpack.c.b16 %v1767, %v1767
  %v1896 = vpack.c.b16 %v1768, %v1768
  %v1897 = vpack.c.b16 %v1769, %v1769
  %v1898 = vpack.c.b16 %v1770, %v1770
  %v1899 = vpack.c.b16 %v1771, %v1771
  %v1900 = vpack.c.b16 %v1772, %v1772
  %v1901 = vpack.c.b16 %v1773, %v1773
  %v1902 = vpack.c.b16 %v1774, %v1774
  %v1903 = vpack.c.b16 %v1775, %v1775
  %v1904 = vpack.c.b16 %v1776, %v1776
  %v1905 = vpack.c.b16 %v1777, %v1777
  %v1906 = vpack.c.b16 %v1778, %v1778
  %v1907 = vpack.c.b16 %v1779, %v1779
  %v1908 = vpack.c.b16 %v1780, %v1780
  %v1909 = vpack.c.b16 %v1781, %v1781
  %v1910 = vpack.c.b16 %v1782, %v1782
  %v1911 = vpack.c.b16 %v1783, %v1783
  %v1912 = vpack.c.b16 %v1784, %v1784
  %v1913 = vpack.c.b16 %v1785, %v1785
  %v1914 = vpack.c.b16 %v1786, %v1786
  %v1915 = vpack.c.b16 %v1787, %v1787
  %v1916 = vpack.c.b16 %v1788, %v1788
  %v1917 = vpack.c.b16 %v1789, %v1789
  %v1918 = vpack.c.b16 %v1790, %v1790
  %v1919 = vpack.c.b16 %v1791, %v1791
  %v1920 = vpack.c.b16 %v1792, %v1792
  %v1921 = vpack.c.b16 %v1793, %v1793
  %v1922 = vpack.c.b16 %v1794, %v1794
  %v1923 = vpack.c.b16 %v1795, %v1795
  %v1924 = vpack.c.b16 %v1796, %v1796
  %v1925 = vpack.c.b16 %v1797, %v1797
  %v1926 = vpack.c.b16 %v1798, %v1798
  %v1927 = vpack.c.b16 %v1799, %v1799
  %v1928 = vpack.c.b16 %v1800, %v1800
  %v1929 = vpack.c.b16 %v1801, %v1801
  %v1930 = vpack.c.b16 %v1802, %v1802
  %v1931 = vpack.c.b16 %v1803, %v1803
  %v1932 = vpack.c.b16 %v1804, %v1804
  %v1933 = vpack.c.b16 %v1805, %v1805
  %v1934 = vpack.c.b16 %v1806, %v1806
  %v1935 = vpack.c.b16 %v1807, %v1807
  %v1936 = vpack.c.b16 %v1808, %v1808
  %v1937 = vpack.c.b16 %v1809, %v1809
  %v1938 = vpack.c.b16 %v1810, %v1810
  %v1939 = vpack.c.b16 %v1811, %v1811
  %v1940 = vpack.c.b16 %v1812, %v1812
  %v1941 = vpack.c.b16 %v1813, %v1813
  %v1942 = vpack.c.b16 %v1814, %v1814
  %v1943 = vpack.c.b16 %v1815, %v1815
  %v1944 = vpack.c.b16 %v1816, %v1816
  %v1945 = vpack.c.b16 %v1817, %v1817
  %v1946 = vpack.c.b16 %v1818, %v1818
  %v1947 = vpack.c.b16 %v1819, %v1819
  %v1948 = vpack.c.b16 %v1820, %v1820
  %v1949 = vpack.c.b16 %v1821, %v1821
  %v1950 = vpack.c.b16 %v1822, %v1822
  %v1951 = vpack.c.b16 %v1823, %v1823
  %v1952 = vpack.c.b16 %v1824, %v1824
  %v1953 = vpack.c.b16 %v1825, %v1825
  %v1954 = vpack.c.b16 %v1826, %v1826
  %v1955 = vpack.c.b16 %v1827, %v1827
  %v1956 = vpack.c.b16 %v1828, %v1828
  %v1957 = vpack.c.b16 %v1829, %v1829
  %v1958 = vpack.c.b16 %v1830, %v1830
  %v1959 = vpack.c.b16 %v1831, %v1831
  %v1960 = vpack.c.b16 %v1832, %v1832
  %v1961 = vpack.c.b16 %v1833, %v1833
  %v1962 = vpack.c.b16 %v1834, %v1834
  %v1963 = vpack.c.b16 %v1835, %v1835
  %v1964 = vpack.c.b16 %v1836, %v1836
  %v1965 = vpack.c.b16 %v1837, %v1837
  %v1966 = vpack.c.b16 %v1838, %v1838
  %v1967 = vpack.c.b16 %v1839, %v1839
  %v1968 = vpack.c.b16 %v1840, %v1840
  %v1969 = vpack.c.b16 %v1841, %v1841
  %v1970 = vpack.c.b16 %v1842, %v1842
  %v1971 = vpack.c.b16 %v1843, %v1843
  %v1972 = vpack.c.b16 %v1844, %v1844
  %v1973 = vpack.c.b16 %v1845, %v1845
  %v1974 = vpack.c.b16 %v1846, %v1846
  %v1975 = vpack.c.b16 %v1847, %v1847
  %v1976 = vpack.c.b16 %v1848, %v1848
  %v1977 = vpack.c.b16 %v1849, %v1849
  %v1978 = vpack.c.b16 %v1850, %v1850
  %v1979 = vpack.c.b16 %v1851, %v1851
  %v1980 = vpack.c.b16 %v1852, %v1852
  %v1981 = vpack.c.b16 %v1853, %v1853
  %v1982 = vpack.c.b16 %v1854, %v1854
  %v1983 = vpack.c.b16 %v1855, %v1855
  %v1984 = vpack.c.b16 %v1856, %v1856
  %v1985 = vpack.c.b16 %v1857, %v1857
  %v1986 = vpack.c.b16 %v1858, %v1858
  %v1987 = vpack.c.b16 %v1859, %v1859
  %v1988 = vpack.c.b16 %v1860, %v1860
  %v1989 = vpack.c.b16 %v1861, %v1861
  %v1990 = vpack.c.b16 %v1862, %v1862
  %2119 = vst [vmem:[%s4] sm:$0xf] %v1863
  %2120 = vst [vmem:[%s4 + $0x4] sm:$0xf] %v1864
  %2121 = vst [vmem:[%s4 + $0x8] sm:$0xf] %v1865
  %2122 = vst [vmem:[%s4 + $0xc] sm:$0xf] %v1866
  %2123 = vst [vmem:[%s4 + $0x10] sm:$0xf] %v1867
  %2124 = vst [vmem:[%s4 + $0x14] sm:$0xf] %v1868
  %2125 = vst [vmem:[%s4 + $0x18] sm:$0xf] %v1869
  %2126 = vst [vmem:[%s4 + $0x1c] sm:$0xf] %v1870
  %2127 = vst [vmem:[%s4 + $0x20] sm:$0xf] %v1871
  %2128 = vst [vmem:[%s4 + $0x24] sm:$0xf] %v1872
  %2129 = vst [vmem:[%s4 + $0x28] sm:$0xf] %v1873
  %2130 = vst [vmem:[%s4 + $0x2c] sm:$0xf] %v1874
  %2131 = vst [vmem:[%s4 + $0x30] sm:$0xf] %v1875
  %2132 = vst [vmem:[%s4 + $0x34] sm:$0xf] %v1876
  %2133 = vst [vmem:[%s4 + $0x38] sm:$0xf] %v1877
  %2134 = vst [vmem:[%s4 + $0x3c] sm:$0xf] %v1878
  %2135 = vst [vmem:[%s4 + $0x40] sm:$0xf] %v1879
  %2136 = vst [vmem:[%s4 + $0x44] sm:$0xf] %v1880
  %2137 = vst [vmem:[%s4 + $0x48] sm:$0xf] %v1881
  %2138 = vst [vmem:[%s4 + $0x4c] sm:$0xf] %v1882
  %2139 = vst [vmem:[%s4 + $0x50] sm:$0xf] %v1883
  %2140 = vst [vmem:[%s4 + $0x54] sm:$0xf] %v1884
  %2141 = vst [vmem:[%s4 + $0x58] sm:$0xf] %v1885
  %2142 = vst [vmem:[%s4 + $0x5c] sm:$0xf] %v1886
  %2143 = vst [vmem:[%s4 + $0x60] sm:$0xf] %v1887
  %2144 = vst [vmem:[%s4 + $0x64] sm:$0xf] %v1888
  %2145 = vst [vmem:[%s4 + $0x68] sm:$0xf] %v1889
  %2146 = vst [vmem:[%s4 + $0x6c] sm:$0xf] %v1890
  %2147 = vst [vmem:[%s4 + $0x70] sm:$0xf] %v1891
  %2148 = vst [vmem:[%s4 + $0x74] sm:$0xf] %v1892
  %2149 = vst [vmem:[%s4 + $0x78] sm:$0xf] %v1893
  %2150 = vst [vmem:[%s4 + $0x7c] sm:$0xf] %v1894
  %2151 = vst [vmem:[%s4 + $0x80] sm:$0xf] %v1895
  %2152 = vst [vmem:[%s4 + $0x84] sm:$0xf] %v1896
  %2153 = vst [vmem:[%s4 + $0x88] sm:$0xf] %v1897
  %2154 = vst [vmem:[%s4 + $0x8c] sm:$0xf] %v1898
  %2155 = vst [vmem:[%s4 + $0x90] sm:$0xf] %v1899
  %2156 = vst [vmem:[%s4 + $0x94] sm:$0xf] %v1900
  %2157 = vst [vmem:[%s4 + $0x98] sm:$0xf] %v1901
  %2158 = vst [vmem:[%s4 + $0x9c] sm:$0xf] %v1902
  %2159 = vst [vmem:[%s4 + $0xa0] sm:$0xf] %v1903
  %2160 = vst [vmem:[%s4 + $0xa4] sm:$0xf] %v1904
  %2161 = vst [vmem:[%s4 + $0xa8] sm:$0xf] %v1905
  %2162 = vst [vmem:[%s4 + $0xac] sm:$0xf] %v1906
  %2163 = vst [vmem:[%s4 + $0xb0] sm:$0xf] %v1907
  %2164 = vst [vmem:[%s4 + $0xb4] sm:$0xf] %v1908
  %2165 = vst [vmem:[%s4 + $0xb8] sm:$0xf] %v1909
  %2166 = vst [vmem:[%s4 + $0xbc] sm:$0xf] %v1910
  %2167 = vst [vmem:[%s4 + $0xc0] sm:$0xf] %v1911
  %2168 = vst [vmem:[%s4 + $0xc4] sm:$0xf] %v1912
  %2169 = vst [vmem:[%s4 + $0xc8] sm:$0xf] %v1913
  %2170 = vst [vmem:[%s4 + $0xcc] sm:$0xf] %v1914
  %2171 = vst [vmem:[%s4 + $0xd0] sm:$0xf] %v1915
  %2172 = vst [vmem:[%s4 + $0xd4] sm:$0xf] %v1916
  %2173 = vst [vmem:[%s4 + $0xd8] sm:$0xf] %v1917
  %2174 = vst [vmem:[%s4 + $0xdc] sm:$0xf] %v1918
  %2175 = vst [vmem:[%s4 + $0xe0] sm:$0xf] %v1919
  %2176 = vst [vmem:[%s4 + $0xe4] sm:$0xf] %v1920
  %2177 = vst [vmem:[%s4 + $0xe8] sm:$0xf] %v1921
  %2178 = vst [vmem:[%s4 + $0xec] sm:$0xf] %v1922
  %2179 = vst [vmem:[%s4 + $0xf0] sm:$0xf] %v1923
  %2180 = vst [vmem:[%s4 + $0xf4] sm:$0xf] %v1924
  %2181 = vst [vmem:[%s4 + $0xf8] sm:$0xf] %v1925
  %2182 = vst [vmem:[%s4 + $0xfc] sm:$0xf] %v1926
  %2183 = vst [vmem:[%s4 + $0x100] sm:$0xf] %v1927
  %2184 = vst [vmem:[%s4 + $0x104] sm:$0xf] %v1928
  %2185 = vst [vmem:[%s4 + $0x108] sm:$0xf] %v1929
  %2186 = vst [vmem:[%s4 + $0x10c] sm:$0xf] %v1930
  %2187 = vst [vmem:[%s4 + $0x110] sm:$0xf] %v1931
  %2188 = vst [vmem:[%s4 + $0x114] sm:$0xf] %v1932
  %2189 = vst [vmem:[%s4 + $0x118] sm:$0xf] %v1933
  %2190 = vst [vmem:[%s4 + $0x11c] sm:$0xf] %v1934
  %2191 = vst [vmem:[%s4 + $0x120] sm:$0xf] %v1935
  %2192 = vst [vmem:[%s4 + $0x124] sm:$0xf] %v1936
  %2193 = vst [vmem:[%s4 + $0x128] sm:$0xf] %v1937
  %2194 = vst [vmem:[%s4 + $0x12c] sm:$0xf] %v1938
  %2195 = vst [vmem:[%s4 + $0x130] sm:$0xf] %v1939
  %2196 = vst [vmem:[%s4 + $0x134] sm:$0xf] %v1940
  %2197 = vst [vmem:[%s4 + $0x138] sm:$0xf] %v1941
  %2198 = vst [vmem:[%s4 + $0x13c] sm:$0xf] %v1942
  %2199 = vst [vmem:[%s4 + $0x140] sm:$0xf] %v1943
  %2200 = vst [vmem:[%s4 + $0x144] sm:$0xf] %v1944
  %2201 = vst [vmem:[%s4 + $0x148] sm:$0xf] %v1945
  %2202 = vst [vmem:[%s4 + $0x14c] sm:$0xf] %v1946
  %2203 = vst [vmem:[%s4 + $0x150] sm:$0xf] %v1947
  %2204 = vst [vmem:[%s4 + $0x154] sm:$0xf] %v1948
  %2205 = vst [vmem:[%s4 + $0x158] sm:$0xf] %v1949
  %2206 = vst [vmem:[%s4 + $0x15c] sm:$0xf] %v1950
  %2207 = vst [vmem:[%s4 + $0x160] sm:$0xf] %v1951
  %2208 = vst [vmem:[%s4 + $0x164] sm:$0xf] %v1952
  %2209 = vst [vmem:[%s4 + $0x168] sm:$0xf] %v1953
  %2210 = vst [vmem:[%s4 + $0x16c] sm:$0xf] %v1954
  %2211 = vst [vmem:[%s4 + $0x170] sm:$0xf] %v1955
  %2212 = vst [vmem:[%s4 + $0x174] sm:$0xf] %v1956
  %2213 = vst [vmem:[%s4 + $0x178] sm:$0xf] %v1957
  %2214 = vst [vmem:[%s4 + $0x17c] sm:$0xf] %v1958
  %2215 = vst [vmem:[%s4 + $0x180] sm:$0xf] %v1959
  %2216 = vst [vmem:[%s4 + $0x184] sm:$0xf] %v1960
  %2217 = vst [vmem:[%s4 + $0x188] sm:$0xf] %v1961
  %2218 = vst [vmem:[%s4 + $0x18c] sm:$0xf] %v1962
  %2219 = vst [vmem:[%s4 + $0x190] sm:$0xf] %v1963
  %2220 = vst [vmem:[%s4 + $0x194] sm:$0xf] %v1964
  %2221 = vst [vmem:[%s4 + $0x198] sm:$0xf] %v1965
  %2222 = vst [vmem:[%s4 + $0x19c] sm:$0xf] %v1966
  %2223 = vst [vmem:[%s4 + $0x1a0] sm:$0xf] %v1967
  %2224 = vst [vmem:[%s4 + $0x1a4] sm:$0xf] %v1968
  %2225 = vst [vmem:[%s4 + $0x1a8] sm:$0xf] %v1969
  %2226 = vst [vmem:[%s4 + $0x1ac] sm:$0xf] %v1970
  %2227 = vst [vmem:[%s4 + $0x1b0] sm:$0xf] %v1971
  %2228 = vst [vmem:[%s4 + $0x1b4] sm:$0xf] %v1972
  %2229 = vst [vmem:[%s4 + $0x1b8] sm:$0xf] %v1973
  %2230 = vst [vmem:[%s4 + $0x1bc] sm:$0xf] %v1974
  %2231 = vst [vmem:[%s4 + $0x1c0] sm:$0xf] %v1975
  %2232 = vst [vmem:[%s4 + $0x1c4] sm:$0xf] %v1976
  %2233 = vst [vmem:[%s4 + $0x1c8] sm:$0xf] %v1977
  %2234 = vst [vmem:[%s4 + $0x1cc] sm:$0xf] %v1978
  %2235 = vst [vmem:[%s4 + $0x1d0] sm:$0xf] %v1979
  %2236 = vst [vmem:[%s4 + $0x1d4] sm:$0xf] %v1980
  %2237 = vst [vmem:[%s4 + $0x1d8] sm:$0xf] %v1981
  %2238 = vst [vmem:[%s4 + $0x1dc] sm:$0xf] %v1982
  %2239 = vst [vmem:[%s4 + $0x1e0] sm:$0xf] %v1983
  %2240 = vst [vmem:[%s4 + $0x1e4] sm:$0xf] %v1984
  %2241 = vst [vmem:[%s4 + $0x1e8] sm:$0xf] %v1985
  %2242 = vst [vmem:[%s4 + $0x1ec] sm:$0xf] %v1986
  %2243 = vst [vmem:[%s4 + $0x1f0] sm:$0xf] %v1987
  %2244 = vst [vmem:[%s4 + $0x1f4] sm:$0xf] %v1988
  %2245 = vst [vmem:[%s4 + $0x1f8] sm:$0xf] %v1989
  %2246 = vst [vmem:[%s4 + $0x1fc] sm:$0xf] %v1990
  // Predicated region
  $region18: #{deconvolution_layer_forward.1} parent=0 // pred_check
    _
  $region19: #{deconvolution_layer_forward.1} parent=0 // pred_check_branch
    %2248 = sbr.rel (0) target = $region21
  $region20: #{deconvolution_layer_forward.1} parent=0 // pred_region
    _
  $region21: #{deconvolution_layer_forward.1} parent=0 // pred_fallthru
    _
  // Predicated region
  $region22: #{deconvolution_layer_forward.1} parent=0 // pred_check
    _
  $region23: #{deconvolution_layer_forward.1} parent=0 // pred_check_branch
    %2250 = sbr.rel (0) target = $region25
  $region24: #{deconvolution_layer_forward.1} parent=0 // pred_region
    _
  $region25: #{deconvolution_layer_forward.1} parent=0 // pred_fallthru
    _

</llo_original>
